<compile_context>
chip_gen: v6e
topology: v6e:2x2x1
jax: 0.10.0
libtpu: 0.0.40
codegen_flags: <defaults>
</compile_context>

<pallas_src>
import functools

import jax
import jax.numpy as jnp
from jax.experimental import pallas as pl
from jax.experimental.pallas import tpu as pltpu


# ----------------------------------------------------------------------------
# Fused Pallas kernel: the whole ESAB forward for Bb batch elements
# ----------------------------------------------------------------------------
def _esab_kernel(loc_ref, glo_ref, mask_ref, w_ref, b_ref, o_ref, taps_ref,
                 *, H, W, nf, nr_p, cpad, bb):
    HW = H * W
    kw = 9 * cpad
    o0, o1 = 3 * nf, 3 * nf + nr_p
    mxu = w_ref.dtype                       # MXU operand dtype (bf16 or f32)

    # Constant operands: sliced out of the two packed slabs, loaded once per
    # grid step and reused across the in-kernel batch loop (row offsets are
    # multiples of 8 sublanes by construction).
    w_head = w_ref[0:o0, 0:2 * nf]          # (3nf, 2nf)   fused 1x1 weights
    w_sh = w_ref[o0:o1, 0:kw]               # (nr_p, 9*cpad) conv_shared taps
    w_gb = w_ref[o1:, 0:kw]                 # (2nf, 9*cpad)  conv_gamma|beta taps
    b_head = b_ref[0:o0, :]                 # (3nf, 1)
    b_sh = b_ref[o0:o1, :]                  # (nr_p, 1)
    b_gb = b_ref[o1:, :]                    # (2nf, 1)
    masks = mask_ref[...]                   # (9, HW) 0/1 tap boundary masks

    if nr_p > nf:
        # conv_shared only writes nf of the cpad rows per tap band; zero once so
        # never-written rows can't hold stale non-finite bits (0 * NaN would
        # poison the f32 accumulator).  Skipped when every row is always written.
        taps_ref[...] = jnp.zeros_like(taps_ref)

    def dot(a, b):
        return jnp.dot(a, b, preferred_element_type=jnp.float32)

    def conv3x3(x_f32, cin, w_flat, bias):
        # One MXU matmul with K = 9*cpad.  Zero padding of the 3x3 conv is
        # supplied by the per-tap 0/1 masks so roll wrap-around / row crossover
        # never leaks in; the centre tap (t==4) needs neither roll nor mask.
        x = x_f32.astype(mxu)
        for t in range(9):
            oy, ox = t // 3 - 1, t % 3 - 1
            s = oy * W + ox
            xs = x if s == 0 else pltpu.roll(x, shift=(-s) % HW, axis=1)
            if t != 4:
                xs = xs * masks[t:t + 1, :]
            taps_ref[t * cpad:t * cpad + cin, :] = xs
        return dot(w_flat, taps_ref[...]) + bias

    def stage(stat, rn):
        style = jnp.maximum(conv3x3(stat, nf, w_sh, b_sh), 0.0)   # conv_shared+ReLU
        gb = conv3x3(style, nr_p, w_gb, b_gb)                     # gamma|beta fused
        gamma = gb[:nf, :]
        beta = gb[nf:, :]
        mean = jnp.mean(stat, axis=-1, keepdims=True)             # (nf, 1)
        var = jnp.sum((stat - mean) ** 2, axis=-1, keepdims=True) / (HW - 1)
        std = jnp.sqrt(var)                                       # unbiased, torch.std
        # use_residual=True:  sigmoid(gamma + std) on the EUP (exp + approx rcp)
        sig = pl.reciprocal(1.0 + jnp.exp(-(gamma + std)), approx=True)
        return rn * sig + (beta + mean)

    def one_batch(b, carry):
        # Fused 1x1 head: fusion | norm(loc) | norm(glo) in a single matmul.
        x2 = jnp.concatenate([loc_ref[b], glo_ref[b]], axis=0).astype(mxu)
        head = dot(w_head, x2) + b_head                           # (3nf, HW) f32
        fusion = head[:nf, :]
        rn_l = head[nf:2 * nf, :]
        rn_g = head[2 * nf:, :]
        out_l = stage(fusion, rn_l)
        o_ref[b] = stage(out_l, rn_g).astype(o_ref.dtype)
        return carry

    jax.lax.fori_loop(0, bb, one_batch, 0, unroll=True)


# ----------------------------------------------------------------------------
# Host-side glue: weight packing, tap masks, pallas_call wrapper
# ----------------------------------------------------------------------------
def _tap_masks(H, W):
    # (9, H*W) 0/1 masks: mask[t, y*W+x] = 1 iff source pixel (y+oy, x+ox) is
    # inside the image for tap t.
    yy = jnp.arange(H)[:, None]
    xx = jnp.arange(W)[None, :]
    rows = []
    for t in range(9):
        oy, ox = t // 3 - 1, t % 3 - 1
        m = ((yy + oy >= 0) & (yy + oy < H) & (xx + ox >= 0) & (xx + ox < W))
        rows.append(m.reshape(H * W))
    return jnp.stack(rows).astype(jnp.float32)


def _tapify_flat(w, cout_pad, cin_pad):
    # (Cout, Cin, 3, 3) -> (cout_pad, 9*cin_pad) with W[o, t*cin_pad + c] =
    # w[o, c, ky, kx], t = ky*3 + kx; padded rows/columns are zero.
    co, ci = w.shape[0], w.shape[1]
    wt = jnp.transpose(w, (0, 2, 3, 1)).reshape(co, 9, ci)
    wt = jnp.pad(wt, ((0, cout_pad - co), (0, 0), (0, cin_pad - ci)))
    return wt.reshape(cout_pad, 9 * cin_pad)


def esab_forward(loc, glo, params, *, mxu_dtype=jnp.bfloat16, batch_block=None):
    """loc, glo: (B, C, H, W) NCHW float32.  Returns (B, C, H, W) float32."""
    B, nf, H, W = loc.shape
    HW = H * W
    assert nf % 8 == 0, "nf must be a multiple of 8 (sublane tile)"
    assert HW % 128 == 0, "H*W must be a multiple of 128 (lane tile)"

    nr = params["w_sh"].shape[0]
    nr_p = ((nr + 7) // 8) * 8              # hidden channels padded to sublanes
    cpad = max(nf, nr_p)                    # per-tap row band in the scratch
    kw = 9 * cpad
    wc = max(2 * nf, kw)                    # packed weight slab width
    wr = 5 * nf + nr_p                      # packed weight/bias slab rows

    # Batch blocking: amortize per-grid-step overhead (v5e/v6e) while keeping
    # >= 2 grid steps when possible so v7x megacore has work for both cores.
    if batch_block is None:
        batch_block = max(1, min(4, B // 2))
    while B % batch_block:
        batch_block -= 1
    bb = batch_block

    # --- packed constant slabs (constant-folded under jit) -------------------
    zeros_ff = jnp.zeros((nf, nf), jnp.float32)
    w_head = jnp.concatenate([
        params["w_1x1"],                                            # fusion 1x1
        jnp.concatenate([params["w_norm"], zeros_ff], axis=1),      # norm(loc)
        jnp.concatenate([zeros_ff, params["w_norm"]], axis=1),      # norm(glo)
    ], axis=0)                                                      # (3nf, 2nf)
    w_sh_f = _tapify_flat(params["w_sh"], nr_p, cpad)               # (nr_p, kw)
    w_gb_f = jnp.concatenate([_tapify_flat(params["w_g"], nf, cpad),
                              _tapify_flat(params["w_b"], nf, cpad)], axis=0)

    w_slab = jnp.concatenate([
        jnp.pad(w_head, ((0, 0), (0, wc - 2 * nf))),
        jnp.pad(w_sh_f, ((0, 0), (0, wc - kw))),
        jnp.pad(w_gb_f, ((0, 0), (0, wc - kw))),
    ], axis=0).astype(mxu_dtype)                                    # (wr, wc)

    b_slab = jnp.concatenate([
        params["b_1x1"], params["b_norm"], params["b_norm"],
        jnp.pad(params["b_sh"], (0, nr_p - nr)),
        params["b_g"], params["b_b"],
    ]).reshape(wr, 1).astype(jnp.float32)                           # (wr, 1)

    masks = _tap_masks(H, W).astype(mxu_dtype)                      # 0/1 exact

    # --- VMEM budget derived from actual buffer sizes (double-buffered) ------
    it = jnp.dtype(mxu_dtype).itemsize
    est = (2 * (3 * bb * nf * HW * 4            # loc + glo + out blocks (f32)
                + 9 * HW * it                   # masks
                + wr * max(wc, 128) * it        # weight slab (lane padded)
                + wr * 128 * 4)                 # bias slab (lane padded)
           + kw * HW * it)                      # tap scratch
    vmem_limit = int(min(128 * 1024 * 1024, max(32 * 1024 * 1024, 4 * est)))

    kernel = functools.partial(_esab_kernel, H=H, W=W, nf=nf, nr_p=nr_p,
                               cpad=cpad, bb=bb)
    batched = lambda i: (i, 0, 0)
    const2 = lambda i: (0, 0)

    out = pl.pallas_call(
        kernel,
        out_shape=jax.ShapeDtypeStruct((B, nf, HW), jnp.float32),
        grid_spec=pltpu.PrefetchScalarGridSpec(
            num_scalar_prefetch=0,
            grid=(B // bb,),
            in_specs=[
                pl.BlockSpec((bb, nf, HW), batched),   # loc
                pl.BlockSpec((bb, nf, HW), batched),   # glo
                pl.BlockSpec((9, HW), const2),         # 3x3 tap boundary masks
                pl.BlockSpec((wr, wc), const2),        # packed weight slab
                pl.BlockSpec((wr, 1), const2),         # packed bias slab
            ],
            out_specs=pl.BlockSpec((bb, nf, HW), batched),
            scratch_shapes=[pltpu.VMEM((kw, HW), mxu_dtype)],   # stacked taps
        ),
        compiler_params=pltpu.CompilerParams(
            dimension_semantics=("parallel",),          # v7x: shard over 2 TCs
            vmem_limit_bytes=vmem_limit),
    )(loc.reshape(B, nf, HW), glo.reshape(B, nf, HW), masks, w_slab, b_slab)
    return out.reshape(B, nf, H, W)


# ----------------------------------------------------------------------------
# Deterministic parameter initialization (shapes from ESAB.__init__)
# ----------------------------------------------------------------------------
def init_params(key, nf, reduction):
    nr = nf // reduction
    ks = jax.random.split(key, 10)
    return {
        "w_1x1": 0.1 * jax.random.normal(ks[0], (nf, 2 * nf), jnp.float32),
        "b_1x1": 0.1 * jax.random.normal(ks[1], (nf,), jnp.float32),
        "w_norm": 0.1 * jax.random.normal(ks[2], (nf, nf), jnp.float32),
        "b_norm": 0.1 * jax.random.normal(ks[3], (nf,), jnp.float32),
        "w_sh": 0.1 * jax.random.normal(ks[4], (nr, nf, 3, 3), jnp.float32),
        "b_sh": 0.1 * jax.random.normal(ks[5], (nr,), jnp.float32),
        # NOTE: ESAB.__init__ zero-initializes conv_gamma / conv_beta.  We use
        # small random values so the correctness check exercises the fused
        # 3x3 gamma|beta path; set to zeros to mirror a freshly built module.
        "w_g": 0.1 * jax.random.normal(ks[6], (nf, nr, 3, 3), jnp.float32),
        "b_g": 0.1 * jax.random.normal(ks[7], (nf,), jnp.float32),
        "w_b": 0.1 * jax.random.normal(ks[8], (nf, nr, 3, 3), jnp.float32),
        "b_b": 0.1 * jax.random.normal(ks[9], (nf,), jnp.float32),
    }


# ----------------------------------------------------------------------------
# Pure-JAX reference (mirrors the PyTorch NCHW code) for correctness check
# ----------------------------------------------------------------------------
def esab_reference(loc, glo, p):
    def conv(x, w, b, pad):
        y = jax.lax.conv_general_dilated(
            x, w, (1, 1), pad,
            dimension_numbers=("NCHW", "OIHW", "NCHW"),
            precision=jax.lax.Precision.HIGHEST)
        return y + b.reshape(1, -1, 1, 1)

    nf = loc.shape[1]
    w1 = p["w_1x1"].reshape(nf, 2 * nf, 1, 1)
    wn = p["w_norm"].reshape(nf, nf, 1, 1)
    fusion = conv(jnp.concatenate([loc, glo], axis=1), w1, p["b_1x1"], "VALID")
    rn_l = conv(loc, wn, p["b_norm"], "VALID")
    rn_g = conv(glo, wn, p["b_norm"], "VALID")

    def stage(stat, rn):
        style = jax.nn.relu(conv(stat, p["w_sh"], p["b_sh"], "SAME"))
        gamma = conv(style, p["w_g"], p["b_g"], "SAME")
        beta = conv(style, p["w_b"], p["b_b"], "SAME")
        b, c, h, w = stat.shape
        flat = stat.reshape(b, c, h * w)
        mean = jnp.mean(flat, axis=-1, keepdims=True)[..., None]
        std = jnp.std(flat, axis=-1, ddof=1, keepdims=True)[..., None]
        gamma = gamma + std          # use_residual=True
        beta = beta + mean
        return rn * jax.nn.sigmoid(gamma) + beta

    out_l = stage(fusion, rn_l)
    return stage(out_l, rn_g)


# ----------------------------------------------------------------------------
if __name__ == "__main__":
    key = jax.random.PRNGKey(0)
    B, nf, H, W = 2, 8, 16, 16
    reduction = 2

    k1, k2, kp = jax.random.split(key, 3)
    loc = jax.random.normal(k1, (B, nf, H, W), jnp.float32)
    glo = jax.random.normal(k2, (B, nf, H, W), jnp.float32)
    params = init_params(kp, nf, reduction)

    ref = esab_reference(loc, glo, params)

    # f32 MXU operands: tight structural check against the f32 reference
    # (only deltas: approx reciprocal in the sigmoid, matmul re-association).
    out_f32 = jax.block_until_ready(
        jax.jit(functools.partial(esab_forward, mxu_dtype=jnp.float32))(
            loc, glo, params))
    assert out_f32.shape == (B, nf, H, W), out_f32.shape
    err32 = float(jnp.max(jnp.abs(out_f32 - ref)))
    assert bool(jnp.allclose(out_f32, ref, atol=1e-2, rtol=1e-2)), (
        f"f32 path max abs err = {err32}")

    # bf16 MXU operands (default, per v6e/v7x feedback): f32 accumulation,
    # looser tolerance for the operand-rounding error.
    out_bf16 = jax.block_until_ready(jax.jit(esab_forward)(loc, glo, params))
    assert out_bf16.shape == (B, nf, H, W), out_bf16.shape
    errbf = float(jnp.max(jnp.abs(out_bf16 - ref)))
    assert bool(jnp.allclose(out_bf16, ref, atol=8e-2, rtol=8e-2)), (
        f"bf16 path max abs err = {errbf}")

    print("KERNEL_OK")
</pallas_src>

<mosaic_0001>
module attributes {stable_mosaic.version = 11 : i64} {
  func.func @_esab_kernel(%arg0: i32, %arg1: memref<1x8x256xf32, #tpu.memory_space<vmem>>, %arg2: memref<1x8x256xf32, #tpu.memory_space<vmem>>, %arg3: memref<9x256xf32, #tpu.memory_space<vmem>>, %arg4: memref<48x72xf32, #tpu.memory_space<vmem>>, %arg5: memref<48x1xf32, #tpu.memory_space<vmem>>, %arg6: memref<1x8x256xf32, #tpu.memory_space<vmem>>, %arg7: memref<72x256xf32, #tpu.memory_space<vmem>>) attributes {dimension_semantics = [#tpu.dimension_semantics<parallel>], iteration_bounds = array<i64: 2>, scalar_prefetch = 0 : i64, scratch_operands = 1 : i64, tpu.core_type = #tpu.core_type<tc>, window_params = [{transform_indices = @transform_0, window_bounds = array<i64: 1, 8, 256>}, {transform_indices = @transform_1, window_bounds = array<i64: 1, 8, 256>}, {pipeline_mode = #tpu.pipeline_mode<synchronous>, transform_indices = @transform_2, window_bounds = array<i64: 9, 256>}, {pipeline_mode = #tpu.pipeline_mode<synchronous>, transform_indices = @transform_3, window_bounds = array<i64: 48, 72>}, {pipeline_mode = #tpu.pipeline_mode<synchronous>, transform_indices = @transform_4, window_bounds = array<i64: 48, 1>}, {transform_indices = @transform_5, window_bounds = array<i64: 1, 8, 256>}]} {
    %c0 = arith.constant 0 : index
    %c0_0 = arith.constant 0 : index
    %0 = vector.load %arg4[%c0, %c0_0] : memref<48x72xf32, #tpu.memory_space<vmem>>, vector<24x16xf32>
    %c24 = arith.constant 24 : index
    %c0_1 = arith.constant 0 : index
    %1 = vector.load %arg4[%c24, %c0_1] : memref<48x72xf32, #tpu.memory_space<vmem>>, vector<8x72xf32>
    %c32 = arith.constant 32 : index
    %c0_2 = arith.constant 0 : index
    %2 = vector.load %arg4[%c32, %c0_2] : memref<48x72xf32, #tpu.memory_space<vmem>>, vector<16x72xf32>
    %c0_3 = arith.constant 0 : index
    %c0_4 = arith.constant 0 : index
    %3 = vector.load %arg5[%c0_3, %c0_4] : memref<48x1xf32, #tpu.memory_space<vmem>>, vector<24x1xf32>
    %c24_5 = arith.constant 24 : index
    %c0_6 = arith.constant 0 : index
    %4 = vector.load %arg5[%c24_5, %c0_6] : memref<48x1xf32, #tpu.memory_space<vmem>>, vector<8x1xf32>
    %c32_7 = arith.constant 32 : index
    %c0_8 = arith.constant 0 : index
    %5 = vector.load %arg5[%c32_7, %c0_8] : memref<48x1xf32, #tpu.memory_space<vmem>>, vector<16x1xf32>
    %c0_9 = arith.constant 0 : index
    %c0_10 = arith.constant 0 : index
    %6 = vector.load %arg3[%c0_9, %c0_10] : memref<9x256xf32, #tpu.memory_space<vmem>>, vector<9x256xf32>
    %c0_i32 = arith.constant 0 : i32
    %7 = arith.index_cast %c0_i32 : i32 to index
    %c0_11 = arith.constant 0 : index
    %c0_12 = arith.constant 0 : index
    %8 = vector.load %arg1[%7, %c0_11, %c0_12] : memref<1x8x256xf32, #tpu.memory_space<vmem>>, vector<1x8x256xf32>
    %9 = vector.shape_cast %8 : vector<1x8x256xf32> to vector<8x256xf32>
    %10 = arith.index_cast %c0_i32 : i32 to index
    %c0_13 = arith.constant 0 : index
    %c0_14 = arith.constant 0 : index
    %11 = vector.load %arg2[%10, %c0_13, %c0_14] : memref<1x8x256xf32, #tpu.memory_space<vmem>>, vector<1x8x256xf32>
    %12 = vector.shape_cast %11 : vector<1x8x256xf32> to vector<8x256xf32>
    %13 = tpu.concatenate %9, %12 in 0 : vector<8x256xf32>, vector<8x256xf32> -> vector<16x256xf32>
    %cst = arith.constant dense<0.000000e+00> : vector<24x256xf32>
    %14 = tpu.matmul %0, %13, %cst {dimension_numbers = #tpu.dot_dimension_numbers<[1], [0], [0], [1], [0, 0, 1, 1], [], []>} : vector<24x16xf32>, vector<16x256xf32>, vector<24x256xf32> -> vector<24x256xf32>
    %15 = vector.broadcast %3 : vector<24x1xf32> to vector<24x256xf32>
    %16 = arith.addf %14, %15 : vector<24x256xf32>
    %17 = vector.extract_strided_slice %16 {offsets = [0, 0], sizes = [8, 256], strides = [1, 1]} : vector<24x256xf32> to vector<8x256xf32>
    %18 = vector.extract_strided_slice %16 {offsets = [8, 0], sizes = [8, 256], strides = [1, 1]} : vector<24x256xf32> to vector<8x256xf32>
    %19 = vector.extract_strided_slice %16 {offsets = [16, 0], sizes = [8, 256], strides = [1, 1]} : vector<24x256xf32> to vector<8x256xf32>
    %c17_i32 = arith.constant 17 : i32
    %20 = tpu.dynamic_rotate %17 by %c17_i32 dim 1 : vector<8x256xf32>, i32 -> vector<8x256xf32>
    %21 = vector.extract_strided_slice %6 {offsets = [0, 0], sizes = [1, 256], strides = [1, 1]} : vector<9x256xf32> to vector<1x256xf32>
    %22 = vector.broadcast %21 : vector<1x256xf32> to vector<8x256xf32>
    %23 = arith.mulf %20, %22 : vector<8x256xf32>
    %c0_15 = arith.constant 0 : index
    %c0_16 = arith.constant 0 : index
    %24 = vector.load %arg7[%c0_15, %c0_16] : memref<72x256xf32, #tpu.memory_space<vmem>>, vector<8x256xf32>
    tpu.vector_store %arg7[%c0_15, %c0_16], %23 {strides = array<i32>} : memref<72x256xf32, #tpu.memory_space<vmem>>, vector<8x256xf32>,
    %c16_i32 = arith.constant 16 : i32
    %25 = tpu.dynamic_rotate %17 by %c16_i32 dim 1 : vector<8x256xf32>, i32 -> vector<8x256xf32>
    %26 = vector.extract_strided_slice %6 {offsets = [1, 0], sizes = [1, 256], strides = [1, 1]} : vector<9x256xf32> to vector<1x256xf32>
    %27 = vector.broadcast %26 : vector<1x256xf32> to vector<8x256xf32>
    %28 = arith.mulf %25, %27 : vector<8x256xf32>
    %c8 = arith.constant 8 : index
    %c0_17 = arith.constant 0 : index
    %29 = vector.load %arg7[%c8, %c0_17] : memref<72x256xf32, #tpu.memory_space<vmem>>, vector<8x256xf32>
    tpu.vector_store %arg7[%c8, %c0_17], %28 {strides = array<i32>} : memref<72x256xf32, #tpu.memory_space<vmem>>, vector<8x256xf32>,
    %c15_i32 = arith.constant 15 : i32
    %30 = tpu.dynamic_rotate %17 by %c15_i32 dim 1 : vector<8x256xf32>, i32 -> vector<8x256xf32>
    %31 = vector.extract_strided_slice %6 {offsets = [2, 0], sizes = [1, 256], strides = [1, 1]} : vector<9x256xf32> to vector<1x256xf32>
    %32 = vector.broadcast %31 : vector<1x256xf32> to vector<8x256xf32>
    %33 = arith.mulf %30, %32 : vector<8x256xf32>
    %c16 = arith.constant 16 : index
    %c0_18 = arith.constant 0 : index
    %34 = vector.load %arg7[%c16, %c0_18] : memref<72x256xf32, #tpu.memory_space<vmem>>, vector<8x256xf32>
    tpu.vector_store %arg7[%c16, %c0_18], %33 {strides = array<i32>} : memref<72x256xf32, #tpu.memory_space<vmem>>, vector<8x256xf32>,
    %c1_i32 = arith.constant 1 : i32
    %35 = tpu.dynamic_rotate %17 by %c1_i32 dim 1 : vector<8x256xf32>, i32 -> vector<8x256xf32>
    %36 = vector.extract_strided_slice %6 {offsets = [3, 0], sizes = [1, 256], strides = [1, 1]} : vector<9x256xf32> to vector<1x256xf32>
    %37 = vector.broadcast %36 : vector<1x256xf32> to vector<8x256xf32>
    %38 = arith.mulf %35, %37 : vector<8x256xf32>
    %c24_19 = arith.constant 24 : index
    %c0_20 = arith.constant 0 : index
    %39 = vector.load %arg7[%c24_19, %c0_20] : memref<72x256xf32, #tpu.memory_space<vmem>>, vector<8x256xf32>
    tpu.vector_store %arg7[%c24_19, %c0_20], %38 {strides = array<i32>} : memref<72x256xf32, #tpu.memory_space<vmem>>, vector<8x256xf32>,
    %c32_21 = arith.constant 32 : index
    %c0_22 = arith.constant 0 : index
    %40 = vector.load %arg7[%c32_21, %c0_22] : memref<72x256xf32, #tpu.memory_space<vmem>>, vector<8x256xf32>
    tpu.vector_store %arg7[%c32_21, %c0_22], %17 {strides = array<i32>} : memref<72x256xf32, #tpu.memory_space<vmem>>, vector<8x256xf32>,
    %c255_i32 = arith.constant 255 : i32
    %41 = tpu.dynamic_rotate %17 by %c255_i32 dim 1 : vector<8x256xf32>, i32 -> vector<8x256xf32>
    %42 = vector.extract_strided_slice %6 {offsets = [5, 0], sizes = [1, 256], strides = [1, 1]} : vector<9x256xf32> to vector<1x256xf32>
    %43 = vector.broadcast %42 : vector<1x256xf32> to vector<8x256xf32>
    %44 = arith.mulf %41, %43 : vector<8x256xf32>
    %c40 = arith.constant 40 : index
    %c0_23 = arith.constant 0 : index
    %45 = vector.load %arg7[%c40, %c0_23] : memref<72x256xf32, #tpu.memory_space<vmem>>, vector<8x256xf32>
    tpu.vector_store %arg7[%c40, %c0_23], %44 {strides = array<i32>} : memref<72x256xf32, #tpu.memory_space<vmem>>, vector<8x256xf32>,
    %c241_i32 = arith.constant 241 : i32
    %46 = tpu.dynamic_rotate %17 by %c241_i32 dim 1 : vector<8x256xf32>, i32 -> vector<8x256xf32>
    %47 = vector.extract_strided_slice %6 {offsets = [6, 0], sizes = [1, 256], strides = [1, 1]} : vector<9x256xf32> to vector<1x256xf32>
    %48 = vector.broadcast %47 : vector<1x256xf32> to vector<8x256xf32>
    %49 = arith.mulf %46, %48 : vector<8x256xf32>
    %c48 = arith.constant 48 : index
    %c0_24 = arith.constant 0 : index
    %50 = vector.load %arg7[%c48, %c0_24] : memref<72x256xf32, #tpu.memory_space<vmem>>, vector<8x256xf32>
    tpu.vector_store %arg7[%c48, %c0_24], %49 {strides = array<i32>} : memref<72x256xf32, #tpu.memory_space<vmem>>, vector<8x256xf32>,
    %c240_i32 = arith.constant 240 : i32
    %51 = tpu.dynamic_rotate %17 by %c240_i32 dim 1 : vector<8x256xf32>, i32 -> vector<8x256xf32>
    %52 = vector.extract_strided_slice %6 {offsets = [7, 0], sizes = [1, 256], strides = [1, 1]} : vector<9x256xf32> to vector<1x256xf32>
    %53 = vector.broadcast %52 : vector<1x256xf32> to vector<8x256xf32>
    %54 = arith.mulf %51, %53 : vector<8x256xf32>
    %c56 = arith.constant 56 : index
    %c0_25 = arith.constant 0 : index
    %55 = vector.load %arg7[%c56, %c0_25] : memref<72x256xf32, #tpu.memory_space<vmem>>, vector<8x256xf32>
    tpu.vector_store %arg7[%c56, %c0_25], %54 {strides = array<i32>} : memref<72x256xf32, #tpu.memory_space<vmem>>, vector<8x256xf32>,
    %c239_i32 = arith.constant 239 : i32
    %56 = tpu.dynamic_rotate %17 by %c239_i32 dim 1 : vector<8x256xf32>, i32 -> vector<8x256xf32>
    %57 = vector.extract_strided_slice %6 {offsets = [8, 0], sizes = [1, 256], strides = [1, 1]} : vector<9x256xf32> to vector<1x256xf32>
    %58 = vector.broadcast %57 : vector<1x256xf32> to vector<8x256xf32>
    %59 = arith.mulf %56, %58 : vector<8x256xf32>
    %c64 = arith.constant 64 : index
    %c0_26 = arith.constant 0 : index
    %60 = vector.load %arg7[%c64, %c0_26] : memref<72x256xf32, #tpu.memory_space<vmem>>, vector<8x256xf32>
    tpu.vector_store %arg7[%c64, %c0_26], %59 {strides = array<i32>} : memref<72x256xf32, #tpu.memory_space<vmem>>, vector<8x256xf32>,
    %c0_27 = arith.constant 0 : index
    %c0_28 = arith.constant 0 : index
    %61 = vector.load %arg7[%c0_27, %c0_28] : memref<72x256xf32, #tpu.memory_space<vmem>>, vector<72x256xf32>
    %cst_29 = arith.constant dense<0.000000e+00> : vector<8x256xf32>
    %62 = tpu.matmul %1, %61, %cst_29 {dimension_numbers = #tpu.dot_dimension_numbers<[1], [0], [0], [1], [0, 0, 1, 1], [], []>} : vector<8x72xf32>, vector<72x256xf32>, vector<8x256xf32> -> vector<8x256xf32>
    %63 = vector.broadcast %4 : vector<8x1xf32> to vector<8x256xf32>
    %64 = arith.addf %62, %63 : vector<8x256xf32>
    %cst_30 = arith.constant 0.000000e+00 : f32
    %65 = vector.broadcast %cst_30 : f32 to vector<8x256xf32>
    %66 = arith.maximumf %64, %65 : vector<8x256xf32>
    %c17_i32_31 = arith.constant 17 : i32
    %67 = tpu.dynamic_rotate %66 by %c17_i32_31 dim 1 : vector<8x256xf32>, i32 -> vector<8x256xf32>
    %68 = vector.extract_strided_slice %6 {offsets = [0, 0], sizes = [1, 256], strides = [1, 1]} : vector<9x256xf32> to vector<1x256xf32>
    %69 = vector.broadcast %68 : vector<1x256xf32> to vector<8x256xf32>
    %70 = arith.mulf %67, %69 : vector<8x256xf32>
    %c0_32 = arith.constant 0 : index
    %c0_33 = arith.constant 0 : index
    %71 = vector.load %arg7[%c0_32, %c0_33] : memref<72x256xf32, #tpu.memory_space<vmem>>, vector<8x256xf32>
    tpu.vector_store %arg7[%c0_32, %c0_33], %70 {strides = array<i32>} : memref<72x256xf32, #tpu.memory_space<vmem>>, vector<8x256xf32>,
    %c16_i32_34 = arith.constant 16 : i32
    %72 = tpu.dynamic_rotate %66 by %c16_i32_34 dim 1 : vector<8x256xf32>, i32 -> vector<8x256xf32>
    %73 = vector.extract_strided_slice %6 {offsets = [1, 0], sizes = [1, 256], strides = [1, 1]} : vector<9x256xf32> to vector<1x256xf32>
    %74 = vector.broadcast %73 : vector<1x256xf32> to vector<8x256xf32>
    %75 = arith.mulf %72, %74 : vector<8x256xf32>
    %c8_35 = arith.constant 8 : index
    %c0_36 = arith.constant 0 : index
    %76 = vector.load %arg7[%c8_35, %c0_36] : memref<72x256xf32, #tpu.memory_space<vmem>>, vector<8x256xf32>
    tpu.vector_store %arg7[%c8_35, %c0_36], %75 {strides = array<i32>} : memref<72x256xf32, #tpu.memory_space<vmem>>, vector<8x256xf32>,
    %c15_i32_37 = arith.constant 15 : i32
    %77 = tpu.dynamic_rotate %66 by %c15_i32_37 dim 1 : vector<8x256xf32>, i32 -> vector<8x256xf32>
    %78 = vector.extract_strided_slice %6 {offsets = [2, 0], sizes = [1, 256], strides = [1, 1]} : vector<9x256xf32> to vector<1x256xf32>
    %79 = vector.broadcast %78 : vector<1x256xf32> to vector<8x256xf32>
    %80 = arith.mulf %77, %79 : vector<8x256xf32>
    %c16_38 = arith.constant 16 : index
    %c0_39 = arith.constant 0 : index
    %81 = vector.load %arg7[%c16_38, %c0_39] : memref<72x256xf32, #tpu.memory_space<vmem>>, vector<8x256xf32>
    tpu.vector_store %arg7[%c16_38, %c0_39], %80 {strides = array<i32>} : memref<72x256xf32, #tpu.memory_space<vmem>>, vector<8x256xf32>,
    %c1_i32_40 = arith.constant 1 : i32
    %82 = tpu.dynamic_rotate %66 by %c1_i32_40 dim 1 : vector<8x256xf32>, i32 -> vector<8x256xf32>
    %83 = vector.extract_strided_slice %6 {offsets = [3, 0], sizes = [1, 256], strides = [1, 1]} : vector<9x256xf32> to vector<1x256xf32>
    %84 = vector.broadcast %83 : vector<1x256xf32> to vector<8x256xf32>
    %85 = arith.mulf %82, %84 : vector<8x256xf32>
    %c24_41 = arith.constant 24 : index
    %c0_42 = arith.constant 0 : index
    %86 = vector.load %arg7[%c24_41, %c0_42] : memref<72x256xf32, #tpu.memory_space<vmem>>, vector<8x256xf32>
    tpu.vector_store %arg7[%c24_41, %c0_42], %85 {strides = array<i32>} : memref<72x256xf32, #tpu.memory_space<vmem>>, vector<8x256xf32>,
    %c32_43 = arith.constant 32 : index
    %c0_44 = arith.constant 0 : index
    %87 = vector.load %arg7[%c32_43, %c0_44] : memref<72x256xf32, #tpu.memory_space<vmem>>, vector<8x256xf32>
    tpu.vector_store %arg7[%c32_43, %c0_44], %66 {strides = array<i32>} : memref<72x256xf32, #tpu.memory_space<vmem>>, vector<8x256xf32>,
    %c255_i32_45 = arith.constant 255 : i32
    %88 = tpu.dynamic_rotate %66 by %c255_i32_45 dim 1 : vector<8x256xf32>, i32 -> vector<8x256xf32>
    %89 = vector.extract_strided_slice %6 {offsets = [5, 0], sizes = [1, 256], strides = [1, 1]} : vector<9x256xf32> to vector<1x256xf32>
    %90 = vector.broadcast %89 : vector<1x256xf32> to vector<8x256xf32>
    %91 = arith.mulf %88, %90 : vector<8x256xf32>
    %c40_46 = arith.constant 40 : index
    %c0_47 = arith.constant 0 : index
    %92 = vector.load %arg7[%c40_46, %c0_47] : memref<72x256xf32, #tpu.memory_space<vmem>>, vector<8x256xf32>
    tpu.vector_store %arg7[%c40_46, %c0_47], %91 {strides = array<i32>} : memref<72x256xf32, #tpu.memory_space<vmem>>, vector<8x256xf32>,
    %c241_i32_48 = arith.constant 241 : i32
    %93 = tpu.dynamic_rotate %66 by %c241_i32_48 dim 1 : vector<8x256xf32>, i32 -> vector<8x256xf32>
    %94 = vector.extract_strided_slice %6 {offsets = [6, 0], sizes = [1, 256], strides = [1, 1]} : vector<9x256xf32> to vector<1x256xf32>
    %95 = vector.broadcast %94 : vector<1x256xf32> to vector<8x256xf32>
    %96 = arith.mulf %93, %95 : vector<8x256xf32>
    %c48_49 = arith.constant 48 : index
    %c0_50 = arith.constant 0 : index
    %97 = vector.load %arg7[%c48_49, %c0_50] : memref<72x256xf32, #tpu.memory_space<vmem>>, vector<8x256xf32>
    tpu.vector_store %arg7[%c48_49, %c0_50], %96 {strides = array<i32>} : memref<72x256xf32, #tpu.memory_space<vmem>>, vector<8x256xf32>,
    %c240_i32_51 = arith.constant 240 : i32
    %98 = tpu.dynamic_rotate %66 by %c240_i32_51 dim 1 : vector<8x256xf32>, i32 -> vector<8x256xf32>
    %99 = vector.extract_strided_slice %6 {offsets = [7, 0], sizes = [1, 256], strides = [1, 1]} : vector<9x256xf32> to vector<1x256xf32>
    %100 = vector.broadcast %99 : vector<1x256xf32> to vector<8x256xf32>
    %101 = arith.mulf %98, %100 : vector<8x256xf32>
    %c56_52 = arith.constant 56 : index
    %c0_53 = arith.constant 0 : index
    %102 = vector.load %arg7[%c56_52, %c0_53] : memref<72x256xf32, #tpu.memory_space<vmem>>, vector<8x256xf32>
    tpu.vector_store %arg7[%c56_52, %c0_53], %101 {strides = array<i32>} : memref<72x256xf32, #tpu.memory_space<vmem>>, vector<8x256xf32>,
    %c239_i32_54 = arith.constant 239 : i32
    %103 = tpu.dynamic_rotate %66 by %c239_i32_54 dim 1 : vector<8x256xf32>, i32 -> vector<8x256xf32>
    %104 = vector.extract_strided_slice %6 {offsets = [8, 0], sizes = [1, 256], strides = [1, 1]} : vector<9x256xf32> to vector<1x256xf32>
    %105 = vector.broadcast %104 : vector<1x256xf32> to vector<8x256xf32>
    %106 = arith.mulf %103, %105 : vector<8x256xf32>
    %c64_55 = arith.constant 64 : index
    %c0_56 = arith.constant 0 : index
    %107 = vector.load %arg7[%c64_55, %c0_56] : memref<72x256xf32, #tpu.memory_space<vmem>>, vector<8x256xf32>
    tpu.vector_store %arg7[%c64_55, %c0_56], %106 {strides = array<i32>} : memref<72x256xf32, #tpu.memory_space<vmem>>, vector<8x256xf32>,
    %c0_57 = arith.constant 0 : index
    %c0_58 = arith.constant 0 : index
    %108 = vector.load %arg7[%c0_57, %c0_58] : memref<72x256xf32, #tpu.memory_space<vmem>>, vector<72x256xf32>
    %cst_59 = arith.constant dense<0.000000e+00> : vector<16x256xf32>
    %109 = tpu.matmul %2, %108, %cst_59 {dimension_numbers = #tpu.dot_dimension_numbers<[1], [0], [0], [1], [0, 0, 1, 1], [], []>} : vector<16x72xf32>, vector<72x256xf32>, vector<16x256xf32> -> vector<16x256xf32>
    %110 = vector.broadcast %5 : vector<16x1xf32> to vector<16x256xf32>
    %111 = arith.addf %109, %110 : vector<16x256xf32>
    %112 = vector.extract_strided_slice %111 {offsets = [0, 0], sizes = [8, 256], strides = [1, 1]} : vector<16x256xf32> to vector<8x256xf32>
    %113 = vector.extract_strided_slice %111 {offsets = [8, 0], sizes = [8, 256], strides = [1, 1]} : vector<16x256xf32> to vector<8x256xf32>
    %cst_60 = arith.constant dense<0.000000e+00> : vector<8xf32>
    %114 = vector.multi_reduction <add>, %17, %cst_60 [1] : vector<8x256xf32> to vector<8xf32>
    %115 = vector.shape_cast %114 : vector<8xf32> to vector<8x1xf32>
    %cst_61 = arith.constant 2.560000e+02 : f32
    %116 = vector.broadcast %cst_61 : f32 to vector<8x1xf32>
    %117 = arith.divf %115, %116 : vector<8x1xf32>
    %118 = vector.broadcast %117 : vector<8x1xf32> to vector<8x256xf32>
    %119 = arith.subf %17, %118 : vector<8x256xf32>
    %120 = arith.mulf %119, %119 : vector<8x256xf32>
    %cst_62 = arith.constant dense<0.000000e+00> : vector<8xf32>
    %121 = vector.multi_reduction <add>, %120, %cst_62 [1] : vector<8x256xf32> to vector<8xf32>
    %122 = vector.shape_cast %121 : vector<8xf32> to vector<8x1xf32>
    %cst_63 = arith.constant 2.550000e+02 : f32
    %123 = vector.broadcast %cst_63 : f32 to vector<8x1xf32>
    %124 = arith.divf %122, %123 : vector<8x1xf32>
    %125 = math.sqrt %124 : vector<8x1xf32>
    %126 = vector.broadcast %125 : vector<8x1xf32> to vector<8x256xf32>
    %127 = arith.addf %112, %126 : vector<8x256xf32>
    %cst_64 = arith.constant 0.000000e+00 : f32
    %128 = vector.broadcast %cst_64 : f32 to vector<8x256xf32>
    %129 = arith.subf %128, %127 : vector<8x256xf32>
    %130 = math.exp %129 : vector<8x256xf32>
    %cst_65 = arith.constant 1.000000e+00 : f32
    %131 = vector.broadcast %cst_65 : f32 to vector<8x256xf32>
    %132 = arith.addf %131, %130 : vector<8x256xf32>
    %133 = tpu.reciprocal %132 {approx = true} : vector<8x256xf32> -> vector<8x256xf32>
    %134 = arith.mulf %18, %133 : vector<8x256xf32>
    %135 = vector.broadcast %117 : vector<8x1xf32> to vector<8x256xf32>
    %136 = arith.addf %113, %135 : vector<8x256xf32>
    %137 = arith.addf %134, %136 : vector<8x256xf32>
    %c17_i32_66 = arith.constant 17 : i32
    %138 = tpu.dynamic_rotate %137 by %c17_i32_66 dim 1 : vector<8x256xf32>, i32 -> vector<8x256xf32>
    %139 = vector.extract_strided_slice %6 {offsets = [0, 0], sizes = [1, 256], strides = [1, 1]} : vector<9x256xf32> to vector<1x256xf32>
    %140 = vector.broadcast %139 : vector<1x256xf32> to vector<8x256xf32>
    %141 = arith.mulf %138, %140 : vector<8x256xf32>
    %c0_67 = arith.constant 0 : index
    %c0_68 = arith.constant 0 : index
    %142 = vector.load %arg7[%c0_67, %c0_68] : memref<72x256xf32, #tpu.memory_space<vmem>>, vector<8x256xf32>
    tpu.vector_store %arg7[%c0_67, %c0_68], %141 {strides = array<i32>} : memref<72x256xf32, #tpu.memory_space<vmem>>, vector<8x256xf32>,
    %c16_i32_69 = arith.constant 16 : i32
    %143 = tpu.dynamic_rotate %137 by %c16_i32_69 dim 1 : vector<8x256xf32>, i32 -> vector<8x256xf32>
    %144 = vector.extract_strided_slice %6 {offsets = [1, 0], sizes = [1, 256], strides = [1, 1]} : vector<9x256xf32> to vector<1x256xf32>
    %145 = vector.broadcast %144 : vector<1x256xf32> to vector<8x256xf32>
    %146 = arith.mulf %143, %145 : vector<8x256xf32>
    %c8_70 = arith.constant 8 : index
    %c0_71 = arith.constant 0 : index
    %147 = vector.load %arg7[%c8_70, %c0_71] : memref<72x256xf32, #tpu.memory_space<vmem>>, vector<8x256xf32>
    tpu.vector_store %arg7[%c8_70, %c0_71], %146 {strides = array<i32>} : memref<72x256xf32, #tpu.memory_space<vmem>>, vector<8x256xf32>,
    %c15_i32_72 = arith.constant 15 : i32
    %148 = tpu.dynamic_rotate %137 by %c15_i32_72 dim 1 : vector<8x256xf32>, i32 -> vector<8x256xf32>
    %149 = vector.extract_strided_slice %6 {offsets = [2, 0], sizes = [1, 256], strides = [1, 1]} : vector<9x256xf32> to vector<1x256xf32>
    %150 = vector.broadcast %149 : vector<1x256xf32> to vector<8x256xf32>
    %151 = arith.mulf %148, %150 : vector<8x256xf32>
    %c16_73 = arith.constant 16 : index
    %c0_74 = arith.constant 0 : index
    %152 = vector.load %arg7[%c16_73, %c0_74] : memref<72x256xf32, #tpu.memory_space<vmem>>, vector<8x256xf32>
    tpu.vector_store %arg7[%c16_73, %c0_74], %151 {strides = array<i32>} : memref<72x256xf32, #tpu.memory_space<vmem>>, vector<8x256xf32>,
    %c1_i32_75 = arith.constant 1 : i32
    %153 = tpu.dynamic_rotate %137 by %c1_i32_75 dim 1 : vector<8x256xf32>, i32 -> vector<8x256xf32>
    %154 = vector.extract_strided_slice %6 {offsets = [3, 0], sizes = [1, 256], strides = [1, 1]} : vector<9x256xf32> to vector<1x256xf32>
    %155 = vector.broadcast %154 : vector<1x256xf32> to vector<8x256xf32>
    %156 = arith.mulf %153, %155 : vector<8x256xf32>
    %c24_76 = arith.constant 24 : index
    %c0_77 = arith.constant 0 : index
    %157 = vector.load %arg7[%c24_76, %c0_77] : memref<72x256xf32, #tpu.memory_space<vmem>>, vector<8x256xf32>
    tpu.vector_store %arg7[%c24_76, %c0_77], %156 {strides = array<i32>} : memref<72x256xf32, #tpu.memory_space<vmem>>, vector<8x256xf32>,
    %c32_78 = arith.constant 32 : index
    %c0_79 = arith.constant 0 : index
    %158 = vector.load %arg7[%c32_78, %c0_79] : memref<72x256xf32, #tpu.memory_space<vmem>>, vector<8x256xf32>
    tpu.vector_store %arg7[%c32_78, %c0_79], %137 {strides = array<i32>} : memref<72x256xf32, #tpu.memory_space<vmem>>, vector<8x256xf32>,
    %c255_i32_80 = arith.constant 255 : i32
    %159 = tpu.dynamic_rotate %137 by %c255_i32_80 dim 1 : vector<8x256xf32>, i32 -> vector<8x256xf32>
    %160 = vector.extract_strided_slice %6 {offsets = [5, 0], sizes = [1, 256], strides = [1, 1]} : vector<9x256xf32> to vector<1x256xf32>
    %161 = vector.broadcast %160 : vector<1x256xf32> to vector<8x256xf32>
    %162 = arith.mulf %159, %161 : vector<8x256xf32>
    %c40_81 = arith.constant 40 : index
    %c0_82 = arith.constant 0 : index
    %163 = vector.load %arg7[%c40_81, %c0_82] : memref<72x256xf32, #tpu.memory_space<vmem>>, vector<8x256xf32>
    tpu.vector_store %arg7[%c40_81, %c0_82], %162 {strides = array<i32>} : memref<72x256xf32, #tpu.memory_space<vmem>>, vector<8x256xf32>,
    %c241_i32_83 = arith.constant 241 : i32
    %164 = tpu.dynamic_rotate %137 by %c241_i32_83 dim 1 : vector<8x256xf32>, i32 -> vector<8x256xf32>
    %165 = vector.extract_strided_slice %6 {offsets = [6, 0], sizes = [1, 256], strides = [1, 1]} : vector<9x256xf32> to vector<1x256xf32>
    %166 = vector.broadcast %165 : vector<1x256xf32> to vector<8x256xf32>
    %167 = arith.mulf %164, %166 : vector<8x256xf32>
    %c48_84 = arith.constant 48 : index
    %c0_85 = arith.constant 0 : index
    %168 = vector.load %arg7[%c48_84, %c0_85] : memref<72x256xf32, #tpu.memory_space<vmem>>, vector<8x256xf32>
    tpu.vector_store %arg7[%c48_84, %c0_85], %167 {strides = array<i32>} : memref<72x256xf32, #tpu.memory_space<vmem>>, vector<8x256xf32>,
    %c240_i32_86 = arith.constant 240 : i32
    %169 = tpu.dynamic_rotate %137 by %c240_i32_86 dim 1 : vector<8x256xf32>, i32 -> vector<8x256xf32>
    %170 = vector.extract_strided_slice %6 {offsets = [7, 0], sizes = [1, 256], strides = [1, 1]} : vector<9x256xf32> to vector<1x256xf32>
    %171 = vector.broadcast %170 : vector<1x256xf32> to vector<8x256xf32>
    %172 = arith.mulf %169, %171 : vector<8x256xf32>
    %c56_87 = arith.constant 56 : index
    %c0_88 = arith.constant 0 : index
    %173 = vector.load %arg7[%c56_87, %c0_88] : memref<72x256xf32, #tpu.memory_space<vmem>>, vector<8x256xf32>
    tpu.vector_store %arg7[%c56_87, %c0_88], %172 {strides = array<i32>} : memref<72x256xf32, #tpu.memory_space<vmem>>, vector<8x256xf32>,
    %c239_i32_89 = arith.constant 239 : i32
    %174 = tpu.dynamic_rotate %137 by %c239_i32_89 dim 1 : vector<8x256xf32>, i32 -> vector<8x256xf32>
    %175 = vector.extract_strided_slice %6 {offsets = [8, 0], sizes = [1, 256], strides = [1, 1]} : vector<9x256xf32> to vector<1x256xf32>
    %176 = vector.broadcast %175 : vector<1x256xf32> to vector<8x256xf32>
    %177 = arith.mulf %174, %176 : vector<8x256xf32>
    %c64_90 = arith.constant 64 : index
    %c0_91 = arith.constant 0 : index
    %178 = vector.load %arg7[%c64_90, %c0_91] : memref<72x256xf32, #tpu.memory_space<vmem>>, vector<8x256xf32>
    tpu.vector_store %arg7[%c64_90, %c0_91], %177 {strides = array<i32>} : memref<72x256xf32, #tpu.memory_space<vmem>>, vector<8x256xf32>,
    %c0_92 = arith.constant 0 : index
    %c0_93 = arith.constant 0 : index
    %179 = vector.load %arg7[%c0_92, %c0_93] : memref<72x256xf32, #tpu.memory_space<vmem>>, vector<72x256xf32>
    %cst_94 = arith.constant dense<0.000000e+00> : vector<8x256xf32>
    %180 = tpu.matmul %1, %179, %cst_94 {dimension_numbers = #tpu.dot_dimension_numbers<[1], [0], [0], [1], [0, 0, 1, 1], [], []>} : vector<8x72xf32>, vector<72x256xf32>, vector<8x256xf32> -> vector<8x256xf32>
    %181 = vector.broadcast %4 : vector<8x1xf32> to vector<8x256xf32>
    %182 = arith.addf %180, %181 : vector<8x256xf32>
    %cst_95 = arith.constant 0.000000e+00 : f32
    %183 = vector.broadcast %cst_95 : f32 to vector<8x256xf32>
    %184 = arith.maximumf %182, %183 : vector<8x256xf32>
    %c17_i32_96 = arith.constant 17 : i32
    %185 = tpu.dynamic_rotate %184 by %c17_i32_96 dim 1 : vector<8x256xf32>, i32 -> vector<8x256xf32>
    %186 = vector.extract_strided_slice %6 {offsets = [0, 0], sizes = [1, 256], strides = [1, 1]} : vector<9x256xf32> to vector<1x256xf32>
    %187 = vector.broadcast %186 : vector<1x256xf32> to vector<8x256xf32>
    %188 = arith.mulf %185, %187 : vector<8x256xf32>
    %c0_97 = arith.constant 0 : index
    %c0_98 = arith.constant 0 : index
    %189 = vector.load %arg7[%c0_97, %c0_98] : memref<72x256xf32, #tpu.memory_space<vmem>>, vector<8x256xf32>
    tpu.vector_store %arg7[%c0_97, %c0_98], %188 {strides = array<i32>} : memref<72x256xf32, #tpu.memory_space<vmem>>, vector<8x256xf32>,
    %c16_i32_99 = arith.constant 16 : i32
    %190 = tpu.dynamic_rotate %184 by %c16_i32_99 dim 1 : vector<8x256xf32>, i32 -> vector<8x256xf32>
    %191 = vector.extract_strided_slice %6 {offsets = [1, 0], sizes = [1, 256], strides = [1, 1]} : vector<9x256xf32> to vector<1x256xf32>
    %192 = vector.broadcast %191 : vector<1x256xf32> to vector<8x256xf32>
    %193 = arith.mulf %190, %192 : vector<8x256xf32>
    %c8_100 = arith.constant 8 : index
    %c0_101 = arith.constant 0 : index
    %194 = vector.load %arg7[%c8_100, %c0_101] : memref<72x256xf32, #tpu.memory_space<vmem>>, vector<8x256xf32>
    tpu.vector_store %arg7[%c8_100, %c0_101], %193 {strides = array<i32>} : memref<72x256xf32, #tpu.memory_space<vmem>>, vector<8x256xf32>,
    %c15_i32_102 = arith.constant 15 : i32
    %195 = tpu.dynamic_rotate %184 by %c15_i32_102 dim 1 : vector<8x256xf32>, i32 -> vector<8x256xf32>
    %196 = vector.extract_strided_slice %6 {offsets = [2, 0], sizes = [1, 256], strides = [1, 1]} : vector<9x256xf32> to vector<1x256xf32>
    %197 = vector.broadcast %196 : vector<1x256xf32> to vector<8x256xf32>
    %198 = arith.mulf %195, %197 : vector<8x256xf32>
    %c16_103 = arith.constant 16 : index
    %c0_104 = arith.constant 0 : index
    %199 = vector.load %arg7[%c16_103, %c0_104] : memref<72x256xf32, #tpu.memory_space<vmem>>, vector<8x256xf32>
    tpu.vector_store %arg7[%c16_103, %c0_104], %198 {strides = array<i32>} : memref<72x256xf32, #tpu.memory_space<vmem>>, vector<8x256xf32>,
    %c1_i32_105 = arith.constant 1 : i32
    %200 = tpu.dynamic_rotate %184 by %c1_i32_105 dim 1 : vector<8x256xf32>, i32 -> vector<8x256xf32>
    %201 = vector.extract_strided_slice %6 {offsets = [3, 0], sizes = [1, 256], strides = [1, 1]} : vector<9x256xf32> to vector<1x256xf32>
    %202 = vector.broadcast %201 : vector<1x256xf32> to vector<8x256xf32>
    %203 = arith.mulf %200, %202 : vector<8x256xf32>
    %c24_106 = arith.constant 24 : index
    %c0_107 = arith.constant 0 : index
    %204 = vector.load %arg7[%c24_106, %c0_107] : memref<72x256xf32, #tpu.memory_space<vmem>>, vector<8x256xf32>
    tpu.vector_store %arg7[%c24_106, %c0_107], %203 {strides = array<i32>} : memref<72x256xf32, #tpu.memory_space<vmem>>, vector<8x256xf32>,
    %c32_108 = arith.constant 32 : index
    %c0_109 = arith.constant 0 : index
    %205 = vector.load %arg7[%c32_108, %c0_109] : memref<72x256xf32, #tpu.memory_space<vmem>>, vector<8x256xf32>
    tpu.vector_store %arg7[%c32_108, %c0_109], %184 {strides = array<i32>} : memref<72x256xf32, #tpu.memory_space<vmem>>, vector<8x256xf32>,
    %c255_i32_110 = arith.constant 255 : i32
    %206 = tpu.dynamic_rotate %184 by %c255_i32_110 dim 1 : vector<8x256xf32>, i32 -> vector<8x256xf32>
    %207 = vector.extract_strided_slice %6 {offsets = [5, 0], sizes = [1, 256], strides = [1, 1]} : vector<9x256xf32> to vector<1x256xf32>
    %208 = vector.broadcast %207 : vector<1x256xf32> to vector<8x256xf32>
    %209 = arith.mulf %206, %208 : vector<8x256xf32>
    %c40_111 = arith.constant 40 : index
    %c0_112 = arith.constant 0 : index
    %210 = vector.load %arg7[%c40_111, %c0_112] : memref<72x256xf32, #tpu.memory_space<vmem>>, vector<8x256xf32>
    tpu.vector_store %arg7[%c40_111, %c0_112], %209 {strides = array<i32>} : memref<72x256xf32, #tpu.memory_space<vmem>>, vector<8x256xf32>,
    %c241_i32_113 = arith.constant 241 : i32
    %211 = tpu.dynamic_rotate %184 by %c241_i32_113 dim 1 : vector<8x256xf32>, i32 -> vector<8x256xf32>
    %212 = vector.extract_strided_slice %6 {offsets = [6, 0], sizes = [1, 256], strides = [1, 1]} : vector<9x256xf32> to vector<1x256xf32>
    %213 = vector.broadcast %212 : vector<1x256xf32> to vector<8x256xf32>
    %214 = arith.mulf %211, %213 : vector<8x256xf32>
    %c48_114 = arith.constant 48 : index
    %c0_115 = arith.constant 0 : index
    %215 = vector.load %arg7[%c48_114, %c0_115] : memref<72x256xf32, #tpu.memory_space<vmem>>, vector<8x256xf32>
    tpu.vector_store %arg7[%c48_114, %c0_115], %214 {strides = array<i32>} : memref<72x256xf32, #tpu.memory_space<vmem>>, vector<8x256xf32>,
    %c240_i32_116 = arith.constant 240 : i32
    %216 = tpu.dynamic_rotate %184 by %c240_i32_116 dim 1 : vector<8x256xf32>, i32 -> vector<8x256xf32>
    %217 = vector.extract_strided_slice %6 {offsets = [7, 0], sizes = [1, 256], strides = [1, 1]} : vector<9x256xf32> to vector<1x256xf32>
    %218 = vector.broadcast %217 : vector<1x256xf32> to vector<8x256xf32>
    %219 = arith.mulf %216, %218 : vector<8x256xf32>
    %c56_117 = arith.constant 56 : index
    %c0_118 = arith.constant 0 : index
    %220 = vector.load %arg7[%c56_117, %c0_118] : memref<72x256xf32, #tpu.memory_space<vmem>>, vector<8x256xf32>
    tpu.vector_store %arg7[%c56_117, %c0_118], %219 {strides = array<i32>} : memref<72x256xf32, #tpu.memory_space<vmem>>, vector<8x256xf32>,
    %c239_i32_119 = arith.constant 239 : i32
    %221 = tpu.dynamic_rotate %184 by %c239_i32_119 dim 1 : vector<8x256xf32>, i32 -> vector<8x256xf32>
    %222 = vector.extract_strided_slice %6 {offsets = [8, 0], sizes = [1, 256], strides = [1, 1]} : vector<9x256xf32> to vector<1x256xf32>
    %223 = vector.broadcast %222 : vector<1x256xf32> to vector<8x256xf32>
    %224 = arith.mulf %221, %223 : vector<8x256xf32>
    %c64_120 = arith.constant 64 : index
    %c0_121 = arith.constant 0 : index
    %225 = vector.load %arg7[%c64_120, %c0_121] : memref<72x256xf32, #tpu.memory_space<vmem>>, vector<8x256xf32>
    tpu.vector_store %arg7[%c64_120, %c0_121], %224 {strides = array<i32>} : memref<72x256xf32, #tpu.memory_space<vmem>>, vector<8x256xf32>,
    %c0_122 = arith.constant 0 : index
    %c0_123 = arith.constant 0 : index
    %226 = vector.load %arg7[%c0_122, %c0_123] : memref<72x256xf32, #tpu.memory_space<vmem>>, vector<72x256xf32>
    %cst_124 = arith.constant dense<0.000000e+00> : vector<16x256xf32>
    %227 = tpu.matmul %2, %226, %cst_124 {dimension_numbers = #tpu.dot_dimension_numbers<[1], [0], [0], [1], [0, 0, 1, 1], [], []>} : vector<16x72xf32>, vector<72x256xf32>, vector<16x256xf32> -> vector<16x256xf32>
    %228 = vector.broadcast %5 : vector<16x1xf32> to vector<16x256xf32>
    %229 = arith.addf %227, %228 : vector<16x256xf32>
    %230 = vector.extract_strided_slice %229 {offsets = [0, 0], sizes = [8, 256], strides = [1, 1]} : vector<16x256xf32> to vector<8x256xf32>
    %231 = vector.extract_strided_slice %229 {offsets = [8, 0], sizes = [8, 256], strides = [1, 1]} : vector<16x256xf32> to vector<8x256xf32>
    %cst_125 = arith.constant dense<0.000000e+00> : vector<8xf32>
    %232 = vector.multi_reduction <add>, %137, %cst_125 [1] : vector<8x256xf32> to vector<8xf32>
    %233 = vector.shape_cast %232 : vector<8xf32> to vector<8x1xf32>
    %cst_126 = arith.constant 2.560000e+02 : f32
    %234 = vector.broadcast %cst_126 : f32 to vector<8x1xf32>
    %235 = arith.divf %233, %234 : vector<8x1xf32>
    %236 = vector.broadcast %235 : vector<8x1xf32> to vector<8x256xf32>
    %237 = arith.subf %137, %236 : vector<8x256xf32>
    %238 = arith.mulf %237, %237 : vector<8x256xf32>
    %cst_127 = arith.constant dense<0.000000e+00> : vector<8xf32>
    %239 = vector.multi_reduction <add>, %238, %cst_127 [1] : vector<8x256xf32> to vector<8xf32>
    %240 = vector.shape_cast %239 : vector<8xf32> to vector<8x1xf32>
    %cst_128 = arith.constant 2.550000e+02 : f32
    %241 = vector.broadcast %cst_128 : f32 to vector<8x1xf32>
    %242 = arith.divf %240, %241 : vector<8x1xf32>
    %243 = math.sqrt %242 : vector<8x1xf32>
    %244 = vector.broadcast %243 : vector<8x1xf32> to vector<8x256xf32>
    %245 = arith.addf %230, %244 : vector<8x256xf32>
    %cst_129 = arith.constant 0.000000e+00 : f32
    %246 = vector.broadcast %cst_129 : f32 to vector<8x256xf32>
    %247 = arith.subf %246, %245 : vector<8x256xf32>
    %248 = math.exp %247 : vector<8x256xf32>
    %cst_130 = arith.constant 1.000000e+00 : f32
    %249 = vector.broadcast %cst_130 : f32 to vector<8x256xf32>
    %250 = arith.addf %249, %248 : vector<8x256xf32>
    %251 = tpu.reciprocal %250 {approx = true} : vector<8x256xf32> -> vector<8x256xf32>
    %252 = arith.mulf %19, %251 : vector<8x256xf32>
    %253 = vector.broadcast %235 : vector<8x1xf32> to vector<8x256xf32>
    %254 = arith.addf %231, %253 : vector<8x256xf32>
    %255 = arith.addf %252, %254 : vector<8x256xf32>
    %256 = arith.index_cast %c0_i32 : i32 to index
    %c0_131 = arith.constant 0 : index
    %c0_132 = arith.constant 0 : index
    %257 = vector.load %arg6[%256, %c0_131, %c0_132] : memref<1x8x256xf32, #tpu.memory_space<vmem>>, vector<1x8x256xf32>
    %258 = vector.shape_cast %257 : vector<1x8x256xf32> to vector<8x256xf32>
    %259 = vector.shape_cast %255 : vector<8x256xf32> to vector<1x8x256xf32>
    tpu.vector_store %arg6[%256, %c0_131, %c0_132], %259 {strides = array<i32>} : memref<1x8x256xf32, #tpu.memory_space<vmem>>, vector<1x8x256xf32>,
    %c1_i32_133 = arith.constant 1 : i32
    return
  }
  func.func @transform_0(%arg0: i32) -> (i32, i32, i32) {
    %c0_i32 = arith.constant 0 : i32
    %c0_i32_0 = arith.constant 0 : i32
    %c0_i32_1 = arith.constant 0 : i32
    return %arg0, %c0_i32, %c0_i32_0 : i32, i32, i32
  }
  func.func @transform_1(%arg0: i32) -> (i32, i32, i32) {
    %c0_i32 = arith.constant 0 : i32
    %c0_i32_0 = arith.constant 0 : i32
    %c0_i32_1 = arith.constant 0 : i32
    return %arg0, %c0_i32, %c0_i32_0 : i32, i32, i32
  }
  func.func @transform_2(%arg0: i32) -> (i32, i32) {
    %c0_i32 = arith.constant 0 : i32
    %c0_i32_0 = arith.constant 0 : i32
    %c0_i32_1 = arith.constant 0 : i32
    return %c0_i32, %c0_i32_0 : i32, i32
  }
  func.func @transform_3(%arg0: i32) -> (i32, i32) {
    %c0_i32 = arith.constant 0 : i32
    %c0_i32_0 = arith.constant 0 : i32
    %c0_i32_1 = arith.constant 0 : i32
    return %c0_i32, %c0_i32_0 : i32, i32
  }
  func.func @transform_4(%arg0: i32) -> (i32, i32) {
    %c0_i32 = arith.constant 0 : i32
    %c0_i32_0 = arith.constant 0 : i32
    %c0_i32_1 = arith.constant 0 : i32
    return %c0_i32, %c0_i32_0 : i32, i32
  }
  func.func @transform_5(%arg0: i32) -> (i32, i32, i32) {
    %c0_i32 = arith.constant 0 : i32
    %c0_i32_0 = arith.constant 0 : i32
    %c0_i32_1 = arith.constant 0 : i32
    return %arg0, %c0_i32, %c0_i32_0 : i32, i32, i32
  }
}

</mosaic_0001>

<llo_original>
// kernel: esab_forward.1
$region0: #{esab_forward.1}
  #allocation0 [shape = 'u32[]', space=smem, size = 0x4, offset = 0x4, fixed_abs, tag = 'smem constant byte address 0x4 - core index']
  #allocation1 [shape = 'u32[144,128]{1,0:T(1,128)}', space=vmem, size = 0x12000, scoped, tag = 'internal scratch']
  #allocation2 [shape = 'f32[72,256]{1,0:T(8,128)}', space=vmem, size = 0x12000, scoped, tag = 'scratch operand']
  %s0 = inlined_call_operand.vmem [shape: f32[2,8,256], index: 0, kind: input, shape index: {}]
  %s1 = inlined_call_operand.vmem [shape: f32[2,8,256], index: 1, kind: input, shape index: {}]
  %s2 = inlined_call_operand.vmem [shape: f32[9,256], index: 2, kind: input, shape index: {}]
  %s3 = inlined_call_operand.vmem [shape: f32[48,72], index: 3, kind: input, shape index: {}]
  %s4 = inlined_call_operand.vmem [shape: f32[48,1], index: 4, kind: input, shape index: {}]
  %s5 = inlined_call_operand.vmem [shape: f32[2,8,256], index: 5, kind: output, shape index: {}]
  %s6 = sld [smem:[#allocation0]]
  $region53: #{esab_forward.1} parent=0
    _
  %s8 = ssub.s32 1, %s6
  %s9 = scalar_select 0, %s8, %s6
  loop: start=0, step=1, limit=4
  $region2: #{esab_forward.1} parent=0 // loop_pre_header
    _
  $region3: #{esab_forward.1} parent=0 // loop_header
    %s11 = sphi 0, %s15
    %p12 = scmp.ge.s32.totalorder %s11, 4
    %s21 = sphi 0, %s23
    %s24 = sphi 0, %s21
    %s25 = sphi 0, %s24
    %s41 = sphi 0, %s25
    %s47 = sphi 0, %s49
    %s50 = sphi 0, %s47
    %s51 = sphi 0, %s50
    %s67 = sphi 0, %s51
    %s71 = sphi 0, %s71
    %s73 = sphi 0, %s71
    %s74 = sphi 0, %s73
    %s88 = sphi 0, %s74
    %s92 = sphi 0, %s92
    %s94 = sphi 0, %s92
    %s95 = sphi 0, %s94
    %s109 = sphi 0, %s95
    %s113 = sphi 0, %s113
    %s115 = sphi 0, %s113
    %s116 = sphi 0, %s115
    %s130 = sphi 0, %s116
    %s136 = sphi 0, %s138
    %s139 = sphi 0, %s136
    %s140 = sphi 0, %s139
    %s156 = sphi 0, %s140
  $region4: #{esab_forward.1} parent=0 // loop_header_branch
    %14 = sbr.rel (%p12) target = $region8
  $region5: #{esab_forward.1} parent=0 // loop_body
    %s16 = ssub.s32 %s11, 1
    %s17 = ssub.s32 %s11, 2
    %s18 = sadd.s32 %s11, 1
    %s19 = ssub.s32 %s11, %s18
    %p20 = scmp.eq.s32.totalorder %s19, 0
    %s22 = sadd.s32 %s21, 1
    %s23 = scalar_select %p20, %s21, %s22
    %p26 = pneg %p20
    %p27 = scmp.eq.s32.totalorder %s11, 1
    %p28 = por %p26, %p27
    %p29 = scmp.ne.s32.totalorder %s21, %s24
    %p30 = scmp.eq.s32.totalorder %s11, 0
    %p31 = por %p29, %p30
    %p32 = scmp.ne.s32.totalorder %s21, %s24
    %p33 = scmp.eq.s32.totalorder %s16, 1
    %p34 = por %p32, %p33
    %p35 = scmp.ne.s32.totalorder %s24, %s25
    %p36 = scmp.eq.s32.totalorder %s16, 0
    %p37 = por %p35, %p36
    %p38 = scmp.ne.s32.totalorder %s24, %s25
    %p39 = scmp.eq.s32.totalorder %s17, 1
    %p40 = por %p38, %p39
    %p42 = scmp.ne.s32.totalorder %s25, %s41
    %p43 = scmp.eq.s32.totalorder %s17, 0
    %p44 = por %p42, %p43
    %s45 = ssub.s32 %s11, %s18
    %p46 = scmp.eq.s32.totalorder %s45, 0
    %s48 = sadd.s32 %s47, 1
    %s49 = scalar_select %p46, %s47, %s48
    %p52 = pneg %p46
    %p53 = scmp.eq.s32.totalorder %s11, 1
    %p54 = por %p52, %p53
    %p55 = scmp.ne.s32.totalorder %s47, %s50
    %p56 = scmp.eq.s32.totalorder %s11, 0
    %p57 = por %p55, %p56
    %p58 = scmp.ne.s32.totalorder %s47, %s50
    %p59 = scmp.eq.s32.totalorder %s16, 1
    %p60 = por %p58, %p59
    %p61 = scmp.ne.s32.totalorder %s50, %s51
    %p62 = scmp.eq.s32.totalorder %s16, 0
    %p63 = por %p61, %p62
    %p64 = scmp.ne.s32.totalorder %s50, %s51
    %p65 = scmp.eq.s32.totalorder %s17, 1
    %p66 = por %p64, %p65
    %p68 = scmp.ne.s32.totalorder %s51, %s67
    %p69 = scmp.eq.s32.totalorder %s17, 0
    %p70 = por %p68, %p69
    %s72 = sadd.s32 %s71, 1
    %p75 = scmp.eq.s32.totalorder %s11, 1
    %p76 = scmp.ne.s32.totalorder %s71, %s73
    %p77 = scmp.eq.s32.totalorder %s11, 0
    %p78 = por %p76, %p77
    %p79 = scmp.ne.s32.totalorder %s71, %s73
    %p80 = scmp.eq.s32.totalorder %s16, 1
    %p81 = por %p79, %p80
    %p82 = scmp.ne.s32.totalorder %s73, %s74
    %p83 = scmp.eq.s32.totalorder %s16, 0
    %p84 = por %p82, %p83
    %p85 = scmp.ne.s32.totalorder %s73, %s74
    %p86 = scmp.eq.s32.totalorder %s17, 1
    %p87 = por %p85, %p86
    %p89 = scmp.ne.s32.totalorder %s74, %s88
    %p90 = scmp.eq.s32.totalorder %s17, 0
    %p91 = por %p89, %p90
    %s93 = sadd.s32 %s92, 1
    %p96 = scmp.eq.s32.totalorder %s11, 1
    %p97 = scmp.ne.s32.totalorder %s92, %s94
    %p98 = scmp.eq.s32.totalorder %s11, 0
    %p99 = por %p97, %p98
    %p100 = scmp.ne.s32.totalorder %s92, %s94
    %p101 = scmp.eq.s32.totalorder %s16, 1
    %p102 = por %p100, %p101
    %p103 = scmp.ne.s32.totalorder %s94, %s95
    %p104 = scmp.eq.s32.totalorder %s16, 0
    %p105 = por %p103, %p104
    %p106 = scmp.ne.s32.totalorder %s94, %s95
    %p107 = scmp.eq.s32.totalorder %s17, 1
    %p108 = por %p106, %p107
    %p110 = scmp.ne.s32.totalorder %s95, %s109
    %p111 = scmp.eq.s32.totalorder %s17, 0
    %p112 = por %p110, %p111
    %s114 = sadd.s32 %s113, 1
    %p117 = scmp.eq.s32.totalorder %s11, 1
    %p118 = scmp.ne.s32.totalorder %s113, %s115
    %p119 = scmp.eq.s32.totalorder %s11, 0
    %p120 = por %p118, %p119
    %p121 = scmp.ne.s32.totalorder %s113, %s115
    %p122 = scmp.eq.s32.totalorder %s16, 1
    %p123 = por %p121, %p122
    %p124 = scmp.ne.s32.totalorder %s115, %s116
    %p125 = scmp.eq.s32.totalorder %s16, 0
    %p126 = por %p124, %p125
    %p127 = scmp.ne.s32.totalorder %s115, %s116
    %p128 = scmp.eq.s32.totalorder %s17, 1
    %p129 = por %p127, %p128
    %p131 = scmp.ne.s32.totalorder %s116, %s130
    %p132 = scmp.eq.s32.totalorder %s17, 0
    %p133 = por %p131, %p132
    %s134 = ssub.s32 %s11, %s18
    %p135 = scmp.eq.s32.totalorder %s134, 0
    %s137 = sadd.s32 %s136, 1
    %s138 = scalar_select %p135, %s136, %s137
    %p141 = pneg %p135
    %p142 = scmp.eq.s32.totalorder %s11, 1
    %p143 = por %p141, %p142
    %p144 = scmp.ne.s32.totalorder %s136, %s139
    %p145 = scmp.eq.s32.totalorder %s11, 0
    %p146 = por %p144, %p145
    %p147 = scmp.ne.s32.totalorder %s136, %s139
    %p148 = scmp.eq.s32.totalorder %s16, 1
    %p149 = por %p147, %p148
    %p150 = scmp.ne.s32.totalorder %s139, %s140
    %p151 = scmp.eq.s32.totalorder %s16, 0
    %p152 = por %p150, %p151
    %p153 = scmp.ne.s32.totalorder %s139, %s140
    %p154 = scmp.eq.s32.totalorder %s17, 1
    %p155 = por %p153, %p154
    %p157 = scmp.ne.s32.totalorder %s140, %s156
    %p158 = scmp.eq.s32.totalorder %s17, 0
    %p159 = por %p157, %p158
    %p160 = scmp.le.s32.totalorder 1, %s11
    %p161 = scmp.lt.s32.totalorder %s11, 3
    %p162 = pnand %p160, %p161
    %p163 = pneg %p162
    // Predicated region
    $region9: #{esab_forward.1} parent=5 // pred_check
      _
    $region10: #{esab_forward.1} parent=5 // pred_check_branch
      %165 = sbr.rel (%p162) target = $region12
    $region11: #{esab_forward.1} parent=5 // pred_region
      %s166 = ssub.s32 %s11, 1
      // Predicated region
      $region13: #{esab_forward.1} parent=11 // pred_check
        %p167 = pneg %p84
      $region14: #{esab_forward.1} parent=11 // pred_check_branch
        %169 = sbr.rel (%p167) target = $region16
      $region15: #{esab_forward.1} parent=11 // pred_region
        _
      $region16: #{esab_forward.1} parent=11 // pred_fallthru
        _
      // Predicated region
      $region17: #{esab_forward.1} parent=11 // pred_check
        %p170 = pneg %p105
      $region18: #{esab_forward.1} parent=11 // pred_check_branch
        %172 = sbr.rel (%p170) target = $region20
      $region19: #{esab_forward.1} parent=11 // pred_region
        _
      $region20: #{esab_forward.1} parent=11 // pred_fallthru
        _
      // Predicated region
      $region21: #{esab_forward.1} parent=11 // pred_check
        %p173 = pneg %p126
      $region22: #{esab_forward.1} parent=11 // pred_check_branch
        %175 = sbr.rel (%p173) target = $region24
      $region23: #{esab_forward.1} parent=11 // pred_region
        _
      $region24: #{esab_forward.1} parent=11 // pred_fallthru
        _
    $region12: #{esab_forward.1} parent=5 // pred_fallthru
      _
    %p176 = scmp.lt.s32.totalorder %s11, 2
    // Predicated region
    $region25: #{esab_forward.1} parent=5 // pred_check
      %p177 = pneg %p176
    $region26: #{esab_forward.1} parent=5 // pred_check_branch
      %179 = sbr.rel (%p177) target = $region28
    $region27: #{esab_forward.1} parent=5 // pred_region
      // Predicated region
      $region29: #{esab_forward.1} parent=27 // pred_check
        %p180 = pneg %p31
      $region30: #{esab_forward.1} parent=27 // pred_check_branch
        %182 = sbr.rel (%p180) target = $region32
      $region31: #{esab_forward.1} parent=27 // pred_region
        %p183 = scmp.lt.s32.totalorder %s11, 1
        %s184 = scalar_select %p183, %s11, 1
        %s185 = smul.addr %s184, 2
        %s186 = smul.addr %s185, 8
        %s187 = scalar_lea.vmem %s0, %s186
      $region32: #{esab_forward.1} parent=27 // pred_fallthru
        _
      // Predicated region
      $region33: #{esab_forward.1} parent=27 // pred_check
        %p188 = pneg %p57
      $region34: #{esab_forward.1} parent=27 // pred_check_branch
        %190 = sbr.rel (%p188) target = $region36
      $region35: #{esab_forward.1} parent=27 // pred_region
        %p191 = scmp.lt.s32.totalorder %s11, 1
        %s192 = scalar_select %p191, %s11, 1
        %s193 = smul.addr %s192, 2
        %s194 = smul.addr %s193, 8
        %s195 = scalar_lea.vmem %s1, %s194
      $region36: #{esab_forward.1} parent=27 // pred_fallthru
        _
    $region28: #{esab_forward.1} parent=5 // pred_fallthru
      _
    %p196 = scmp.le.s32.totalorder 1, %s11
    %p197 = scmp.lt.s32.totalorder %s11, 3
    %p198 = pnand %p196, %p197
    %p199 = pneg %p198
    // Predicated region
    $region37: #{esab_forward.1} parent=5 // pred_check
      _
    $region38: #{esab_forward.1} parent=5 // pred_check_branch
      %201 = sbr.rel (%p198) target = $region40
    $region39: #{esab_forward.1} parent=5 // pred_region
      %s202 = ssub.s32 %s11, 1
      %p203 = scmp.lt.s32.totalorder %s16, 1
      %s204 = scalar_select %p203, %s16, 1
      %s205 = smul.addr %s204, 2
      %s206 = smul.addr %s205, 8
      %s207 = scalar_lea.vmem %s0, %s206
      %p208 = pneg %p37
      %p209 = pneg %p34
      %p210 = scmp.lt.s32.totalorder %s16, 1
      %s211 = scalar_select %p210, %s16, 1
      %s212 = smul.addr %s211, 2
      %s213 = smul.addr %s212, 8
      %s214 = scalar_lea.vmem %s1, %s213
      %p215 = pneg %p63
      %p216 = pneg %p60
      %p217 = pneg %p84
      %p218 = pneg %p81
      %p219 = pneg %p105
      %p220 = pneg %p102
      %p221 = pneg %p126
      %p222 = pneg %p123
      %p223 = pneg %p152
      %p224 = pneg %p149
      %p225 = scmp.lt.s32.totalorder %s16, 1
      %s226 = scalar_select %p225, %s16, 1
      %s227 = smul.addr %s226, 2
      %s228 = smul.addr %s227, 8
      %s229 = scalar_lea.vmem %s5, %s228
      %p230 = scmp.lt.s32.totalorder %s16, 1
      %s231 = scalar_select %p230, %s16, 1
      %s232 = smul.addr %s231, 2
      %s233 = smul.addr %s232, 8
      %s234 = scalar_lea.vmem %s0, %s233
      %p235 = scmp.lt.s32.totalorder %s16, 1
      %s236 = scalar_select %p235, %s16, 1
      %s237 = smul.addr %s236, 2
      %s238 = smul.addr %s237, 8
      %s239 = scalar_lea.vmem %s1, %s238
      %p240 = scmp.lt.s32.totalorder %s16, 1
      %s241 = scalar_select %p240, %s16, 1
      %s242 = smul.addr %s241, 2
      %s243 = smul.addr %s242, 8
      %s244 = scalar_lea.vmem %s5, %s243
      %v245 = vld [vmem:[%s3] sm:$0xff]
      %v246 = vld [vmem:[%s3 + $0x8] sm:$0xff]
      %v247 = vld [vmem:[%s3 + $0x10] sm:$0xff]
      %v248 = vld [vmem:[%s3 + $0x18] sm:$0xff]
      %v249 = vld [vmem:[%s3 + $0x20] sm:$0xff]
      %v250 = vld [vmem:[%s3 + $0x28] sm:$0xff]
      %v251 = vld [vmem:[%s4] sm:$0xff]
      %v252 = vld [vmem:[%s4 + $0x8] sm:$0xff]
      %v253 = vld [vmem:[%s4 + $0x10] sm:$0xff]
      %v254 = vld [vmem:[%s4 + $0x18] sm:$0xff]
      %v255 = vld [vmem:[%s4 + $0x20] sm:$0xff]
      %v256 = vld [vmem:[%s4 + $0x28] sm:$0xff]
      %v257 = vld [vmem:[%s2] sm:$0xff]
      %v258 = vld [vmem:[%s2 + $0x8] sm:$0xff]
      %v259 = vld [vmem:[%s2 + $0x10] sm:$0x1]
      %v260 = vld [vmem:[%s2 + $0x18] sm:$0x1]
      %v261 = vld [vmem:[%s234] sm:$0xff]
      %v262 = vld [vmem:[%s234 + $0x8] sm:$0xff]
      %v263 = vld [vmem:[%s239] sm:$0xff]
      %v264 = vld [vmem:[%s239 + $0x8] sm:$0xff]
      %266 = vset.pattern.permute.xlu0 0
      %267 = vperm.xlu0 %266, %v251
      %v268 = vpop.permute.xlu0 %267
      %271 = vset.pattern.permute.xlu0 0
      %272 = vperm.xlu0 %271, %v252
      %v273 = vpop.permute.xlu0 %272
      %276 = vset.pattern.permute.xlu0 0
      %277 = vperm.xlu0 %276, %v253
      %v278 = vpop.permute.xlu0 %277
      %vm280 = vcmask 130048
      %v282 = vsel %vm280, %v245, 0
      %v285 = vsel %vm280, %v246, 0
      %v288 = vsel %vm280, %v247, 0
      %290 = vmatprep.subr.mxu0 0.0
      %291 = vmatpush1.msra.mxu0 0.0
      %292 = vmatprep.subr.mxu0 0.0
      %293 = vmatpush1.msra.mxu0 0.0
      %294 = vmatprep.subr.mxu0 0.0
      %295 = vmatpush1.msra.mxu0 0.0
      %296 = vmatprep.subr.mxu0 0.0
      %297 = vmatpush1.msra.mxu0 0.0
      %298 = vmatprep.subr.mxu0 0.0
      %299 = vmatpush1.msra.mxu0 0.0
      %300 = vmatprep.subr.mxu0 0.0
      %301 = vmatpush1.msra.mxu0 0.0
      %302 = vmatprep.subr.mxu0 0.0
      %303 = vmatpush1.msra.mxu0 0.0
      %304 = vmatprep.subr.mxu0 0.0
      %305 = vmatpush1.msra.mxu0 0.0
      %306 = vmatprep.subr.mxu0 0.0
      %307 = vmatpush1.msra.mxu0 0.0
      %308 = vmatprep.subr.mxu0 0.0
      %309 = vmatpush1.msra.mxu0 0.0
      %310 = vmatprep.subr.mxu0 0.0
      %311 = vmatpush1.msra.mxu0 0.0
      %312 = vmatprep.subr.mxu0 0.0
      %313 = vmatpush1.msra.mxu0 0.0
      %314 = vmatprep.subr.mxu0 0.0
      %315 = vmatpush1.msra.mxu0 0.0
      %316 = vmatprep.subr.mxu0 0.0
      %317 = vmatpush1.msra.mxu0 0.0
      %318 = vmatprep.subr.mxu0 %v264
      %319 = vmatpush1.msra.mxu0 %v263
      %320 = vmatprep.subr.mxu0 %v262
      %321 = vmatpush1.msra.mxu0 %v261
      %322 = vmatprep.subr.mxu0 0.0
      %323 = vmatpush2.msra.mxu0 0.0
      %324 = vmatprep.subr.mxu0 0.0
      %325 = vmatpush2.msra.mxu0 0.0
      %326 = vmatprep.subr.mxu0 0.0
      %327 = vmatpush2.msra.mxu0 0.0
      %328 = vmatprep.subr.mxu0 0.0
      %329 = vmatpush2.msra.mxu0 0.0
      %330 = vmatprep.subr.mxu0 0.0
      %331 = vmatpush2.msra.mxu0 0.0
      %332 = vmatprep.subr.mxu0 0.0
      %333 = vmatpush2.msra.mxu0 0.0
      %334 = vmatprep.subr.mxu0 0.0
      %335 = vmatpush2.msra.mxu0 0.0
      %336 = vmatprep.subr.mxu0 0.0
      %337 = vmatpush2.msra.mxu0 0.0
      %338 = vmatprep.subr.mxu0 0.0
      %339 = vmatpush2.msra.mxu0 0.0
      %340 = vmatprep.subr.mxu0 0.0
      %341 = vmatpush2.msra.mxu0 0.0
      %342 = vmatprep.subr.mxu0 0.0
      %343 = vmatpush2.msra.mxu0 0.0
      %344 = vmatprep.subr.mxu0 0.0
      %345 = vmatpush2.msra.mxu0 0.0
      %346 = vmatprep.subr.mxu0 0.0
      %347 = vmatpush2.msra.mxu0 0.0
      %348 = vmatprep.subr.mxu0 0.0
      %349 = vmatpush2.msra.mxu0 0.0
      %350 = vmatprep.subr.mxu0 0.0
      %351 = vmatpush2.msra.mxu0 0.0
      %352 = vmatprep.subr.mxu0 0.0
      %353 = vmatpush2.msra.mxu0 0.0
      %354 = vmatprep.mubr.f32.mxu0 0.0
      %355 = vmatmul.mubr.f32.gmra.mxu0 %v282
      %v356 = vpop.f32.mrf.mxu0
      %v357 = vadd.f32 %v268, %v356
      %v358 = vpop.f32.mrf.mxu0
      %v359 = vadd.f32 %v268, %v358
      %360 = vmatprep.mubr.f32.mxu0 0.0
      %361 = vmatmul.mubr.f32.gmra.mxu0 %v285
      %v362 = vpop.f32.mrf.mxu0
      %v363 = vadd.f32 %v273, %v362
      %v364 = vpop.f32.mrf.mxu0
      %v365 = vadd.f32 %v273, %v364
      %366 = vmatprep.mubr.f32.mxu0 0.0
      %367 = vmatmul.mubr.f32.gmra.mxu0 %v288
      %v368 = vpop.f32.mrf.mxu0
      %v369 = vadd.f32 %v278, %v368
      %v370 = vpop.f32.mrf.mxu0
      %v371 = vadd.f32 %v278, %v370
      %372 = vdwg.mxu0
      %373 = vrot.lane.b32.xlu0 %v357, 17
      %v374 = vpop.permute.xlu0 %373
      %375 = vrot.lane.b32.xlu0 %v359, 17
      %v376 = vpop.permute.xlu0 %375
      %v377 = vlaneseq
      %v378 = vand.u32 %v377, 127
      %vm379 = vcmp.lt.s32.totalorder %v378, 17
      %v380 = vsel %vm379, %v374, %v376
      %v381 = vsel %vm379, %v376, %v374
      %v382 = vlaneseq
      %v383 = vshrl.u32 %v382, 7
      %v384 = vsub.s32 0, %v383
      %v385 = vrot.slane %v257, %v384
      %v386 = vlaneseq
      %v387 = vshrl.u32 %v386, 7
      %v388 = vsub.s32 0, %v387
      %v389 = vrot.slane %v258, %v388
      %v390 = vmul.f32 %v381, %v385
      %v391 = vmul.f32 %v380, %v389
      %392 = vst [vmem:[#allocation2] sm:$0xff] %v390
      %393 = vst [vmem:[#allocation2 + $0x8] sm:$0xff] %v391
      %394 = vrot.lane.b32.xlu0 %v357, 16
      %v395 = vpop.permute.xlu0 %394
      %396 = vrot.lane.b32.xlu0 %v359, 16
      %v397 = vpop.permute.xlu0 %396
      %vm398 = vcmp.lt.s32.totalorder %v378, 16
      %v399 = vsel %vm398, %v395, %v397
      %v400 = vsel %vm398, %v397, %v395
      %v401 = vlaneseq
      %v402 = vshrl.u32 %v401, 7
      %v403 = vsub.s32 1, %v402
      %v404 = vrot.slane %v257, %v403
      %v405 = vlaneseq
      %v406 = vshrl.u32 %v405, 7
      %v407 = vsub.s32 1, %v406
      %v408 = vrot.slane %v258, %v407
      %v409 = vmul.f32 %v400, %v404
      %v410 = vmul.f32 %v399, %v408
      %411 = vst [vmem:[#allocation2 + $0x10] sm:$0xff] %v409
      %412 = vst [vmem:[#allocation2 + $0x18] sm:$0xff] %v410
      %413 = vrot.lane.b32.xlu0 %v357, 15
      %v414 = vpop.permute.xlu0 %413
      %415 = vrot.lane.b32.xlu0 %v359, 15
      %v416 = vpop.permute.xlu0 %415
      %vm417 = vcmp.lt.s32.totalorder %v378, 15
      %v418 = vsel %vm417, %v414, %v416
      %v419 = vsel %vm417, %v416, %v414
      %v420 = vlaneseq
      %v421 = vshrl.u32 %v420, 7
      %v422 = vsub.s32 2, %v421
      %v423 = vrot.slane %v257, %v422
      %v424 = vlaneseq
      %v425 = vshrl.u32 %v424, 7
      %v426 = vsub.s32 2, %v425
      %v427 = vrot.slane %v258, %v426
      %v428 = vmul.f32 %v419, %v423
      %v429 = vmul.f32 %v418, %v427
      %430 = vst [vmem:[#allocation2 + $0x20] sm:$0xff] %v428
      %431 = vst [vmem:[#allocation2 + $0x28] sm:$0xff] %v429
      %432 = vrot.lane.b32.xlu0 %v357, 1
      %v433 = vpop.permute.xlu0 %432
      %434 = vrot.lane.b32.xlu0 %v359, 1
      %v435 = vpop.permute.xlu0 %434
      %vm436 = vcmp.lt.s32.totalorder %v378, 1
      %v437 = vsel %vm436, %v433, %v435
      %v438 = vsel %vm436, %v435, %v433
      %v439 = vlaneseq
      %v440 = vshrl.u32 %v439, 7
      %v441 = vsub.s32 3, %v440
      %v442 = vrot.slane %v257, %v441
      %v443 = vlaneseq
      %v444 = vshrl.u32 %v443, 7
      %v445 = vsub.s32 3, %v444
      %v446 = vrot.slane %v258, %v445
      %v447 = vmul.f32 %v438, %v442
      %v448 = vmul.f32 %v437, %v446
      %449 = vst [vmem:[#allocation2 + $0x30] sm:$0xff] %v447
      %450 = vst [vmem:[#allocation2 + $0x38] sm:$0xff] %v448
      %451 = vst [vmem:[#allocation2 + $0x40] sm:$0xff] %v357
      %452 = vst [vmem:[#allocation2 + $0x48] sm:$0xff] %v359
      %453 = vrot.lane.b32.xlu0 %v357, 127
      %v454 = vpop.permute.xlu0 %453
      %455 = vrot.lane.b32.xlu0 %v359, 127
      %v456 = vpop.permute.xlu0 %455
      %vm457 = vcmp.lt.s32.totalorder %v378, 127
      %v458 = vsel %vm457, %v454, %v456
      %v459 = vsel %vm457, %v456, %v454
      %v460 = vlaneseq
      %v461 = vshrl.u32 %v460, 7
      %v462 = vsub.s32 5, %v461
      %v463 = vrot.slane %v257, %v462
      %v464 = vlaneseq
      %v465 = vshrl.u32 %v464, 7
      %v466 = vsub.s32 5, %v465
      %v467 = vrot.slane %v258, %v466
      %v468 = vmul.f32 %v458, %v463
      %v469 = vmul.f32 %v459, %v467
      %470 = vst [vmem:[#allocation2 + $0x50] sm:$0xff] %v468
      %471 = vst [vmem:[#allocation2 + $0x58] sm:$0xff] %v469
      %472 = vrot.lane.b32.xlu0 %v357, 113
      %v473 = vpop.permute.xlu0 %472
      %474 = vrot.lane.b32.xlu0 %v359, 113
      %v475 = vpop.permute.xlu0 %474
      %vm476 = vcmp.lt.s32.totalorder %v378, 113
      %v477 = vsel %vm476, %v473, %v475
      %v478 = vsel %vm476, %v475, %v473
      %v479 = vlaneseq
      %v480 = vshrl.u32 %v479, 7
      %v481 = vsub.s32 6, %v480
      %v482 = vrot.slane %v257, %v481
      %v483 = vlaneseq
      %v484 = vshrl.u32 %v483, 7
      %v485 = vsub.s32 6, %v484
      %v486 = vrot.slane %v258, %v485
      %v487 = vmul.f32 %v477, %v482
      %v488 = vmul.f32 %v478, %v486
      %489 = vst [vmem:[#allocation2 + $0x60] sm:$0xff] %v487
      %490 = vst [vmem:[#allocation2 + $0x68] sm:$0xff] %v488
      %491 = vrot.lane.b32.xlu0 %v357, 112
      %v492 = vpop.permute.xlu0 %491
      %493 = vrot.lane.b32.xlu0 %v359, 112
      %v494 = vpop.permute.xlu0 %493
      %vm495 = vcmp.lt.s32.totalorder %v378, 112
      %v496 = vsel %vm495, %v492, %v494
      %v497 = vsel %vm495, %v494, %v492
      %v498 = vlaneseq
      %v499 = vshrl.u32 %v498, 7
      %v500 = vsub.s32 7, %v499
      %v501 = vrot.slane %v257, %v500
      %v502 = vlaneseq
      %v503 = vshrl.u32 %v502, 7
      %v504 = vsub.s32 7, %v503
      %v505 = vrot.slane %v258, %v504
      %v506 = vmul.f32 %v496, %v501
      %v507 = vmul.f32 %v497, %v505
      %508 = vst [vmem:[#allocation2 + $0x70] sm:$0xff] %v506
      %509 = vst [vmem:[#allocation2 + $0x78] sm:$0xff] %v507
      %510 = vrot.lane.b32.xlu0 %v357, 111
      %v511 = vpop.permute.xlu0 %510
      %512 = vrot.lane.b32.xlu0 %v359, 111
      %v513 = vpop.permute.xlu0 %512
      %vm514 = vcmp.lt.s32.totalorder %v378, 111
      %v515 = vsel %vm514, %v511, %v513
      %v516 = vsel %vm514, %v513, %v511
      %v517 = vlaneseq
      %v518 = vshrl.u32 %v517, 7
      %v519 = vsub.s32 0, %v518
      %v520 = vrot.slane %v259, %v519
      %v521 = vlaneseq
      %v522 = vshrl.u32 %v521, 7
      %v523 = vsub.s32 0, %v522
      %v524 = vrot.slane %v260, %v523
      %v525 = vmul.f32 %v515, %v520
      %v526 = vmul.f32 %v516, %v524
      %527 = vst [vmem:[#allocation2 + $0x80] sm:$0xff] %v525
      %528 = vst [vmem:[#allocation2 + $0x88] sm:$0xff] %v526
      %v529 = vld [vmem:[#allocation2] sm:$0xff]
      %v530 = vld [vmem:[#allocation2 + $0x8] sm:$0xff]
      %v531 = vld [vmem:[#allocation2 + $0x10] sm:$0xff]
      %v532 = vld [vmem:[#allocation2 + $0x18] sm:$0xff]
      %v533 = vld [vmem:[#allocation2 + $0x20] sm:$0xff]
      %v534 = vld [vmem:[#allocation2 + $0x28] sm:$0xff]
      %v535 = vld [vmem:[#allocation2 + $0x30] sm:$0xff]
      %v536 = vld [vmem:[#allocation2 + $0x38] sm:$0xff]
      %v537 = vld [vmem:[#allocation2 + $0x40] sm:$0xff]
      %v538 = vld [vmem:[#allocation2 + $0x48] sm:$0xff]
      %v539 = vld [vmem:[#allocation2 + $0x50] sm:$0xff]
      %v540 = vld [vmem:[#allocation2 + $0x58] sm:$0xff]
      %v541 = vld [vmem:[#allocation2 + $0x60] sm:$0xff]
      %v542 = vld [vmem:[#allocation2 + $0x68] sm:$0xff]
      %v543 = vld [vmem:[#allocation2 + $0x70] sm:$0xff]
      %v544 = vld [vmem:[#allocation2 + $0x78] sm:$0xff]
      %v545 = vld [vmem:[#allocation2 + $0x80] sm:$0xff]
      %v546 = vld [vmem:[#allocation2 + $0x88] sm:$0xff]
      %548 = vset.pattern.permute.xlu0 0
      %549 = vperm.xlu0 %548, %v254
      %v550 = vpop.permute.xlu0 %549
      %vm552 = vcmask 588800
      %v554 = vsel %vm552, %v248, 0
      %556 = vmatprep.subr.mxu0 0.0
      %557 = vmatpush1.msra.mxu0 0.0
      %558 = vmatprep.subr.mxu0 0.0
      %559 = vmatpush1.msra.mxu0 0.0
      %560 = vmatprep.subr.mxu0 0.0
      %561 = vmatpush1.msra.mxu0 0.0
      %562 = vmatprep.subr.mxu0 0.0
      %563 = vmatpush1.msra.mxu0 0.0
      %564 = vmatprep.subr.mxu0 0.0
      %565 = vmatpush1.msra.mxu0 0.0
      %566 = vmatprep.subr.mxu0 0.0
      %567 = vmatpush1.msra.mxu0 0.0
      %568 = vmatprep.subr.mxu0 0.0
      %569 = vmatpush1.msra.mxu0 0.0
      %570 = vmatprep.subr.mxu0 %v546
      %571 = vmatpush1.msra.mxu0 %v545
      %572 = vmatprep.subr.mxu0 %v544
      %573 = vmatpush1.msra.mxu0 %v543
      %574 = vmatprep.subr.mxu0 %v542
      %575 = vmatpush1.msra.mxu0 %v541
      %576 = vmatprep.subr.mxu0 %v540
      %577 = vmatpush1.msra.mxu0 %v539
      %578 = vmatprep.subr.mxu0 %v538
      %579 = vmatpush1.msra.mxu0 %v537
      %580 = vmatprep.subr.mxu0 %v536
      %581 = vmatpush1.msra.mxu0 %v535
      %582 = vmatprep.subr.mxu0 %v534
      %583 = vmatpush1.msra.mxu0 %v533
      %584 = vmatprep.subr.mxu0 %v532
      %585 = vmatpush1.msra.mxu0 %v531
      %586 = vmatprep.subr.mxu0 %v530
      %587 = vmatpush1.msra.mxu0 %v529
      %588 = vmatprep.subr.mxu0 0.0
      %589 = vmatpush2.msra.mxu0 0.0
      %590 = vmatprep.subr.mxu0 0.0
      %591 = vmatpush2.msra.mxu0 0.0
      %592 = vmatprep.subr.mxu0 0.0
      %593 = vmatpush2.msra.mxu0 0.0
      %594 = vmatprep.subr.mxu0 0.0
      %595 = vmatpush2.msra.mxu0 0.0
      %596 = vmatprep.subr.mxu0 0.0
      %597 = vmatpush2.msra.mxu0 0.0
      %598 = vmatprep.subr.mxu0 0.0
      %599 = vmatpush2.msra.mxu0 0.0
      %600 = vmatprep.subr.mxu0 0.0
      %601 = vmatpush2.msra.mxu0 0.0
      %602 = vmatprep.subr.mxu0 0.0
      %603 = vmatpush2.msra.mxu0 0.0
      %604 = vmatprep.subr.mxu0 0.0
      %605 = vmatpush2.msra.mxu0 0.0
      %606 = vmatprep.subr.mxu0 0.0
      %607 = vmatpush2.msra.mxu0 0.0
      %608 = vmatprep.subr.mxu0 0.0
      %609 = vmatpush2.msra.mxu0 0.0
      %610 = vmatprep.subr.mxu0 0.0
      %611 = vmatpush2.msra.mxu0 0.0
      %612 = vmatprep.subr.mxu0 0.0
      %613 = vmatpush2.msra.mxu0 0.0
      %614 = vmatprep.subr.mxu0 0.0
      %615 = vmatpush2.msra.mxu0 0.0
      %616 = vmatprep.subr.mxu0 0.0
      %617 = vmatpush2.msra.mxu0 0.0
      %618 = vmatprep.subr.mxu0 0.0
      %619 = vmatpush2.msra.mxu0 0.0
      %620 = vmatprep.mubr.f32.mxu0 0.0
      %621 = vmatmul.mubr.f32.gmra.mxu0 %v554
      %v622 = vpop.f32.mrf.mxu0
      %v623 = vadd.f32 %v550, %v622
      %v624 = vpop.f32.mrf.mxu0
      %v625 = vadd.f32 %v550, %v624
      %626 = vdwg.mxu0
      %v627 = vmax.f32 %v623, 0.0
      %v628 = vmax.f32 %v625, 0.0
      %629 = vrot.lane.b32.xlu0 %v627, 17
      %v630 = vpop.permute.xlu0 %629
      %631 = vrot.lane.b32.xlu0 %v628, 17
      %v632 = vpop.permute.xlu0 %631
      %v633 = vsel %vm379, %v630, %v632
      %v634 = vsel %vm379, %v632, %v630
      %v635 = vmul.f32 %v634, %v385
      %v636 = vmul.f32 %v633, %v389
      %637 = vst [vmem:[#allocation2] sm:$0xff] %v635
      %638 = vst [vmem:[#allocation2 + $0x8] sm:$0xff] %v636
      %639 = vrot.lane.b32.xlu0 %v627, 16
      %v640 = vpop.permute.xlu0 %639
      %641 = vrot.lane.b32.xlu0 %v628, 16
      %v642 = vpop.permute.xlu0 %641
      %v643 = vsel %vm398, %v640, %v642
      %v644 = vsel %vm398, %v642, %v640
      %v645 = vmul.f32 %v644, %v404
      %v646 = vmul.f32 %v643, %v408
      %647 = vst [vmem:[#allocation2 + $0x10] sm:$0xff] %v645
      %648 = vst [vmem:[#allocation2 + $0x18] sm:$0xff] %v646
      %649 = vrot.lane.b32.xlu0 %v627, 15
      %v650 = vpop.permute.xlu0 %649
      %651 = vrot.lane.b32.xlu0 %v628, 15
      %v652 = vpop.permute.xlu0 %651
      %v653 = vsel %vm417, %v650, %v652
      %v654 = vsel %vm417, %v652, %v650
      %v655 = vmul.f32 %v654, %v423
      %v656 = vmul.f32 %v653, %v427
      %657 = vst [vmem:[#allocation2 + $0x20] sm:$0xff] %v655
      %658 = vst [vmem:[#allocation2 + $0x28] sm:$0xff] %v656
      %659 = vrot.lane.b32.xlu0 %v627, 1
      %v660 = vpop.permute.xlu0 %659
      %661 = vrot.lane.b32.xlu0 %v628, 1
      %v662 = vpop.permute.xlu0 %661
      %v663 = vsel %vm436, %v660, %v662
      %v664 = vsel %vm436, %v662, %v660
      %v665 = vmul.f32 %v664, %v442
      %v666 = vmul.f32 %v663, %v446
      %667 = vst [vmem:[#allocation2 + $0x30] sm:$0xff] %v665
      %668 = vst [vmem:[#allocation2 + $0x38] sm:$0xff] %v666
      %669 = vst [vmem:[#allocation2 + $0x40] sm:$0xff] %v627
      %670 = vst [vmem:[#allocation2 + $0x48] sm:$0xff] %v628
      %671 = vrot.lane.b32.xlu0 %v627, 127
      %v672 = vpop.permute.xlu0 %671
      %673 = vrot.lane.b32.xlu0 %v628, 127
      %v674 = vpop.permute.xlu0 %673
      %v675 = vsel %vm457, %v672, %v674
      %v676 = vsel %vm457, %v674, %v672
      %v677 = vmul.f32 %v675, %v463
      %v678 = vmul.f32 %v676, %v467
      %679 = vst [vmem:[#allocation2 + $0x50] sm:$0xff] %v677
      %680 = vst [vmem:[#allocation2 + $0x58] sm:$0xff] %v678
      %681 = vrot.lane.b32.xlu0 %v627, 113
      %v682 = vpop.permute.xlu0 %681
      %683 = vrot.lane.b32.xlu0 %v628, 113
      %v684 = vpop.permute.xlu0 %683
      %v685 = vsel %vm476, %v682, %v684
      %v686 = vsel %vm476, %v684, %v682
      %v687 = vmul.f32 %v685, %v482
      %v688 = vmul.f32 %v686, %v486
      %689 = vst [vmem:[#allocation2 + $0x60] sm:$0xff] %v687
      %690 = vst [vmem:[#allocation2 + $0x68] sm:$0xff] %v688
      %691 = vrot.lane.b32.xlu0 %v627, 112
      %v692 = vpop.permute.xlu0 %691
      %693 = vrot.lane.b32.xlu0 %v628, 112
      %v694 = vpop.permute.xlu0 %693
      %v695 = vsel %vm495, %v692, %v694
      %v696 = vsel %vm495, %v694, %v692
      %v697 = vmul.f32 %v695, %v501
      %v698 = vmul.f32 %v696, %v505
      %699 = vst [vmem:[#allocation2 + $0x70] sm:$0xff] %v697
      %700 = vst [vmem:[#allocation2 + $0x78] sm:$0xff] %v698
      %701 = vrot.lane.b32.xlu0 %v627, 111
      %v702 = vpop.permute.xlu0 %701
      %703 = vrot.lane.b32.xlu0 %v628, 111
      %v704 = vpop.permute.xlu0 %703
      %v705 = vsel %vm514, %v702, %v704
      %v706 = vsel %vm514, %v704, %v702
      %v707 = vmul.f32 %v705, %v520
      %v708 = vmul.f32 %v706, %v524
      %709 = vst [vmem:[#allocation2 + $0x80] sm:$0xff] %v707
      %710 = vst [vmem:[#allocation2 + $0x88] sm:$0xff] %v708
      %v711 = vld [vmem:[#allocation2] sm:$0xff]
      %v712 = vld [vmem:[#allocation2 + $0x8] sm:$0xff]
      %v713 = vld [vmem:[#allocation2 + $0x10] sm:$0xff]
      %v714 = vld [vmem:[#allocation2 + $0x18] sm:$0xff]
      %v715 = vld [vmem:[#allocation2 + $0x20] sm:$0xff]
      %v716 = vld [vmem:[#allocation2 + $0x28] sm:$0xff]
      %v717 = vld [vmem:[#allocation2 + $0x30] sm:$0xff]
      %v718 = vld [vmem:[#allocation2 + $0x38] sm:$0xff]
      %v719 = vld [vmem:[#allocation2 + $0x40] sm:$0xff]
      %v720 = vld [vmem:[#allocation2 + $0x48] sm:$0xff]
      %v721 = vld [vmem:[#allocation2 + $0x50] sm:$0xff]
      %v722 = vld [vmem:[#allocation2 + $0x58] sm:$0xff]
      %v723 = vld [vmem:[#allocation2 + $0x60] sm:$0xff]
      %v724 = vld [vmem:[#allocation2 + $0x68] sm:$0xff]
      %v725 = vld [vmem:[#allocation2 + $0x70] sm:$0xff]
      %v726 = vld [vmem:[#allocation2 + $0x78] sm:$0xff]
      %v727 = vld [vmem:[#allocation2 + $0x80] sm:$0xff]
      %v728 = vld [vmem:[#allocation2 + $0x88] sm:$0xff]
      %730 = vset.pattern.permute.xlu0 0
      %731 = vperm.xlu0 %730, %v255
      %v732 = vpop.permute.xlu0 %731
      %735 = vset.pattern.permute.xlu0 0
      %736 = vperm.xlu0 %735, %v256
      %v737 = vpop.permute.xlu0 %736
      %v740 = vsel %vm552, %v249, 0
      %v743 = vsel %vm552, %v250, 0
      %745 = vmatprep.subr.mxu0 0.0
      %746 = vmatpush1.msra.mxu0 0.0
      %747 = vmatprep.subr.mxu0 0.0
      %748 = vmatpush1.msra.mxu0 0.0
      %749 = vmatprep.subr.mxu0 0.0
      %750 = vmatpush1.msra.mxu0 0.0
      %751 = vmatprep.subr.mxu0 0.0
      %752 = vmatpush1.msra.mxu0 0.0
      %753 = vmatprep.subr.mxu0 0.0
      %754 = vmatpush1.msra.mxu0 0.0
      %755 = vmatprep.subr.mxu0 0.0
      %756 = vmatpush1.msra.mxu0 0.0
      %757 = vmatprep.subr.mxu0 0.0
      %758 = vmatpush1.msra.mxu0 0.0
      %759 = vmatprep.subr.mxu0 %v728
      %760 = vmatpush1.msra.mxu0 %v727
      %761 = vmatprep.subr.mxu0 %v726
      %762 = vmatpush1.msra.mxu0 %v725
      %763 = vmatprep.subr.mxu0 %v724
      %764 = vmatpush1.msra.mxu0 %v723
      %765 = vmatprep.subr.mxu0 %v722
      %766 = vmatpush1.msra.mxu0 %v721
      %767 = vmatprep.subr.mxu0 %v720
      %768 = vmatpush1.msra.mxu0 %v719
      %769 = vmatprep.subr.mxu0 %v718
      %770 = vmatpush1.msra.mxu0 %v717
      %771 = vmatprep.subr.mxu0 %v716
      %772 = vmatpush1.msra.mxu0 %v715
      %773 = vmatprep.subr.mxu0 %v714
      %774 = vmatpush1.msra.mxu0 %v713
      %775 = vmatprep.subr.mxu0 %v712
      %776 = vmatpush1.msra.mxu0 %v711
      %777 = vmatprep.subr.mxu0 0.0
      %778 = vmatpush2.msra.mxu0 0.0
      %779 = vmatprep.subr.mxu0 0.0
      %780 = vmatpush2.msra.mxu0 0.0
      %781 = vmatprep.subr.mxu0 0.0
      %782 = vmatpush2.msra.mxu0 0.0
      %783 = vmatprep.subr.mxu0 0.0
      %784 = vmatpush2.msra.mxu0 0.0
      %785 = vmatprep.subr.mxu0 0.0
      %786 = vmatpush2.msra.mxu0 0.0
      %787 = vmatprep.subr.mxu0 0.0
      %788 = vmatpush2.msra.mxu0 0.0
      %789 = vmatprep.subr.mxu0 0.0
      %790 = vmatpush2.msra.mxu0 0.0
      %791 = vmatprep.subr.mxu0 0.0
      %792 = vmatpush2.msra.mxu0 0.0
      %793 = vmatprep.subr.mxu0 0.0
      %794 = vmatpush2.msra.mxu0 0.0
      %795 = vmatprep.subr.mxu0 0.0
      %796 = vmatpush2.msra.mxu0 0.0
      %797 = vmatprep.subr.mxu0 0.0
      %798 = vmatpush2.msra.mxu0 0.0
      %799 = vmatprep.subr.mxu0 0.0
      %800 = vmatpush2.msra.mxu0 0.0
      %801 = vmatprep.subr.mxu0 0.0
      %802 = vmatpush2.msra.mxu0 0.0
      %803 = vmatprep.subr.mxu0 0.0
      %804 = vmatpush2.msra.mxu0 0.0
      %805 = vmatprep.subr.mxu0 0.0
      %806 = vmatpush2.msra.mxu0 0.0
      %807 = vmatprep.subr.mxu0 0.0
      %808 = vmatpush2.msra.mxu0 0.0
      %809 = vmatprep.mubr.f32.mxu0 0.0
      %810 = vmatmul.mubr.f32.gmra.mxu0 %v740
      %v811 = vpop.f32.mrf.mxu0
      %v812 = vadd.f32 %v732, %v811
      %v813 = vpop.f32.mrf.mxu0
      %v814 = vadd.f32 %v732, %v813
      %815 = vmatprep.mubr.f32.mxu0 0.0
      %816 = vmatmul.mubr.f32.gmra.mxu0 %v743
      %v817 = vpop.f32.mrf.mxu0
      %v818 = vadd.f32 %v737, %v817
      %v819 = vpop.f32.mrf.mxu0
      %v820 = vadd.f32 %v737, %v819
      %821 = vdwg.mxu0
      %v822 = vadd.f32 %v357, %v359
      %823 = vadd.xlane.f32.xlu0 %v822
      %v824 = vpop.xlane.xlu0 %823
      %v825 = vrcp.pop 256.0
      %v826 = vmul.f32 %v824, %v825
      %v827 = vsub.f32 %v357, %v826
      %v828 = vsub.f32 %v359, %v826
      %v829 = vmul.f32 %v827, %v827
      %v830 = vmul.f32 %v828, %v828
      %v831 = vadd.f32 %v829, %v830
      %832 = vadd.xlane.f32.xlu0 %v831
      %v833 = vpop.xlane.xlu0 %832
      %v834 = vrcp.pop 255.0
      %v835 = vmul.f32 %v833, %v834
      %v836 = vrsqrt.pop %v835
      %v837 = vmul.f32 %v835, %v836
      %vm838 = vcmp.eq.f32.partialorder %v835, inf
      %v839 = vsel %vm838, %v835, %v837
      %vm840 = vcmp.eq.f32.partialorder %v835, 0.0
      %v841 = vand.u32 %v835, 2147483648
      %v842 = vsel %vm840, %v841, %v839
      %v843 = vadd.f32 %v812, %v842
      %v844 = vadd.f32 %v814, %v842
      %v845 = vsub.f32 0.0, %v843
      %v846 = vsub.f32 0.0, %v844
      %v847 = vmul.f32 %v845, 1.442695
      %v848 = vpow.pop %v847
      %v849 = vmul.f32 %v846, 1.442695
      %v850 = vpow.pop %v849
      %v851 = vadd.f32 %v848, 1.0
      %v852 = vadd.f32 %v850, 1.0
      %v853 = vrcp.pop %v851
      %v854 = vrcp.pop %v852
      %v855 = vmul.f32 %v363, %v853
      %v856 = vmul.f32 %v365, %v854
      %v857 = vadd.f32 %v818, %v826
      %v858 = vadd.f32 %v820, %v826
      %v859 = vadd.f32 %v855, %v857
      %v860 = vadd.f32 %v856, %v858
      %861 = vrot.lane.b32.xlu0 %v859, 17
      %v862 = vpop.permute.xlu0 %861
      %863 = vrot.lane.b32.xlu0 %v860, 17
      %v864 = vpop.permute.xlu0 %863
      %v865 = vsel %vm379, %v862, %v864
      %v866 = vsel %vm379, %v864, %v862
      %v867 = vmul.f32 %v866, %v385
      %v868 = vmul.f32 %v865, %v389
      %869 = vst [vmem:[#allocation2] sm:$0xff] %v867
      %870 = vst [vmem:[#allocation2 + $0x8] sm:$0xff] %v868
      %871 = vrot.lane.b32.xlu0 %v859, 16
      %v872 = vpop.permute.xlu0 %871
      %873 = vrot.lane.b32.xlu0 %v860, 16
      %v874 = vpop.permute.xlu0 %873
      %v875 = vsel %vm398, %v872, %v874
      %v876 = vsel %vm398, %v874, %v872
      %v877 = vmul.f32 %v876, %v404
      %v878 = vmul.f32 %v875, %v408
      %879 = vst [vmem:[#allocation2 + $0x10] sm:$0xff] %v877
      %880 = vst [vmem:[#allocation2 + $0x18] sm:$0xff] %v878
      %881 = vrot.lane.b32.xlu0 %v859, 15
      %v882 = vpop.permute.xlu0 %881
      %883 = vrot.lane.b32.xlu0 %v860, 15
      %v884 = vpop.permute.xlu0 %883
      %v885 = vsel %vm417, %v882, %v884
      %v886 = vsel %vm417, %v884, %v882
      %v887 = vmul.f32 %v886, %v423
      %v888 = vmul.f32 %v885, %v427
      %889 = vst [vmem:[#allocation2 + $0x20] sm:$0xff] %v887
      %890 = vst [vmem:[#allocation2 + $0x28] sm:$0xff] %v888
      %891 = vrot.lane.b32.xlu0 %v859, 1
      %v892 = vpop.permute.xlu0 %891
      %893 = vrot.lane.b32.xlu0 %v860, 1
      %v894 = vpop.permute.xlu0 %893
      %v895 = vsel %vm436, %v892, %v894
      %v896 = vsel %vm436, %v894, %v892
      %v897 = vmul.f32 %v896, %v442
      %v898 = vmul.f32 %v895, %v446
      %899 = vst [vmem:[#allocation2 + $0x30] sm:$0xff] %v897
      %900 = vst [vmem:[#allocation2 + $0x38] sm:$0xff] %v898
      %901 = vst [vmem:[#allocation2 + $0x40] sm:$0xff] %v859
      %902 = vst [vmem:[#allocation2 + $0x48] sm:$0xff] %v860
      %903 = vrot.lane.b32.xlu0 %v859, 127
      %v904 = vpop.permute.xlu0 %903
      %905 = vrot.lane.b32.xlu0 %v860, 127
      %v906 = vpop.permute.xlu0 %905
      %v907 = vsel %vm457, %v904, %v906
      %v908 = vsel %vm457, %v906, %v904
      %v909 = vmul.f32 %v907, %v463
      %v910 = vmul.f32 %v908, %v467
      %911 = vst [vmem:[#allocation2 + $0x50] sm:$0xff] %v909
      %912 = vst [vmem:[#allocation2 + $0x58] sm:$0xff] %v910
      %913 = vrot.lane.b32.xlu0 %v859, 113
      %v914 = vpop.permute.xlu0 %913
      %915 = vrot.lane.b32.xlu0 %v860, 113
      %v916 = vpop.permute.xlu0 %915
      %v917 = vsel %vm476, %v914, %v916
      %v918 = vsel %vm476, %v916, %v914
      %v919 = vmul.f32 %v917, %v482
      %v920 = vmul.f32 %v918, %v486
      %921 = vst [vmem:[#allocation2 + $0x60] sm:$0xff] %v919
      %922 = vst [vmem:[#allocation2 + $0x68] sm:$0xff] %v920
      %923 = vrot.lane.b32.xlu0 %v859, 112
      %v924 = vpop.permute.xlu0 %923
      %925 = vrot.lane.b32.xlu0 %v860, 112
      %v926 = vpop.permute.xlu0 %925
      %v927 = vsel %vm495, %v924, %v926
      %v928 = vsel %vm495, %v926, %v924
      %v929 = vmul.f32 %v927, %v501
      %v930 = vmul.f32 %v928, %v505
      %931 = vst [vmem:[#allocation2 + $0x70] sm:$0xff] %v929
      %932 = vst [vmem:[#allocation2 + $0x78] sm:$0xff] %v930
      %933 = vrot.lane.b32.xlu0 %v859, 111
      %v934 = vpop.permute.xlu0 %933
      %935 = vrot.lane.b32.xlu0 %v860, 111
      %v936 = vpop.permute.xlu0 %935
      %v937 = vsel %vm514, %v934, %v936
      %v938 = vsel %vm514, %v936, %v934
      %v939 = vmul.f32 %v937, %v520
      %v940 = vmul.f32 %v938, %v524
      %941 = vst [vmem:[#allocation2 + $0x80] sm:$0xff] %v939
      %942 = vst [vmem:[#allocation2 + $0x88] sm:$0xff] %v940
      %v943 = vld [vmem:[#allocation2] sm:$0xff]
      %v944 = vld [vmem:[#allocation2 + $0x8] sm:$0xff]
      %v945 = vld [vmem:[#allocation2 + $0x10] sm:$0xff]
      %v946 = vld [vmem:[#allocation2 + $0x18] sm:$0xff]
      %v947 = vld [vmem:[#allocation2 + $0x20] sm:$0xff]
      %v948 = vld [vmem:[#allocation2 + $0x28] sm:$0xff]
      %v949 = vld [vmem:[#allocation2 + $0x30] sm:$0xff]
      %v950 = vld [vmem:[#allocation2 + $0x38] sm:$0xff]
      %v951 = vld [vmem:[#allocation2 + $0x40] sm:$0xff]
      %v952 = vld [vmem:[#allocation2 + $0x48] sm:$0xff]
      %v953 = vld [vmem:[#allocation2 + $0x50] sm:$0xff]
      %v954 = vld [vmem:[#allocation2 + $0x58] sm:$0xff]
      %v955 = vld [vmem:[#allocation2 + $0x60] sm:$0xff]
      %v956 = vld [vmem:[#allocation2 + $0x68] sm:$0xff]
      %v957 = vld [vmem:[#allocation2 + $0x70] sm:$0xff]
      %v958 = vld [vmem:[#allocation2 + $0x78] sm:$0xff]
      %v959 = vld [vmem:[#allocation2 + $0x80] sm:$0xff]
      %v960 = vld [vmem:[#allocation2 + $0x88] sm:$0xff]
      %961 = vmatprep.subr.mxu0 0.0
      %962 = vmatpush1.msra.mxu0 0.0
      %963 = vmatprep.subr.mxu0 0.0
      %964 = vmatpush1.msra.mxu0 0.0
      %965 = vmatprep.subr.mxu0 0.0
      %966 = vmatpush1.msra.mxu0 0.0
      %967 = vmatprep.subr.mxu0 0.0
      %968 = vmatpush1.msra.mxu0 0.0
      %969 = vmatprep.subr.mxu0 0.0
      %970 = vmatpush1.msra.mxu0 0.0
      %971 = vmatprep.subr.mxu0 0.0
      %972 = vmatpush1.msra.mxu0 0.0
      %973 = vmatprep.subr.mxu0 0.0
      %974 = vmatpush1.msra.mxu0 0.0
      %975 = vmatprep.subr.mxu0 %v960
      %976 = vmatpush1.msra.mxu0 %v959
      %977 = vmatprep.subr.mxu0 %v958
      %978 = vmatpush1.msra.mxu0 %v957
      %979 = vmatprep.subr.mxu0 %v956
      %980 = vmatpush1.msra.mxu0 %v955
      %981 = vmatprep.subr.mxu0 %v954
      %982 = vmatpush1.msra.mxu0 %v953
      %983 = vmatprep.subr.mxu0 %v952
      %984 = vmatpush1.msra.mxu0 %v951
      %985 = vmatprep.subr.mxu0 %v950
      %986 = vmatpush1.msra.mxu0 %v949
      %987 = vmatprep.subr.mxu0 %v948
      %988 = vmatpush1.msra.mxu0 %v947
      %989 = vmatprep.subr.mxu0 %v946
      %990 = vmatpush1.msra.mxu0 %v945
      %991 = vmatprep.subr.mxu0 %v944
      %992 = vmatpush1.msra.mxu0 %v943
      %993 = vmatprep.subr.mxu0 0.0
      %994 = vmatpush2.msra.mxu0 0.0
      %995 = vmatprep.subr.mxu0 0.0
      %996 = vmatpush2.msra.mxu0 0.0
      %997 = vmatprep.subr.mxu0 0.0
      %998 = vmatpush2.msra.mxu0 0.0
      %999 = vmatprep.subr.mxu0 0.0
      %1000 = vmatpush2.msra.mxu0 0.0
      %1001 = vmatprep.subr.mxu0 0.0
      %1002 = vmatpush2.msra.mxu0 0.0
      %1003 = vmatprep.subr.mxu0 0.0
      %1004 = vmatpush2.msra.mxu0 0.0
      %1005 = vmatprep.subr.mxu0 0.0
      %1006 = vmatpush2.msra.mxu0 0.0
      %1007 = vmatprep.subr.mxu0 0.0
      %1008 = vmatpush2.msra.mxu0 0.0
      %1009 = vmatprep.subr.mxu0 0.0
      %1010 = vmatpush2.msra.mxu0 0.0
      %1011 = vmatprep.subr.mxu0 0.0
      %1012 = vmatpush2.msra.mxu0 0.0
      %1013 = vmatprep.subr.mxu0 0.0
      %1014 = vmatpush2.msra.mxu0 0.0
      %1015 = vmatprep.subr.mxu0 0.0
      %1016 = vmatpush2.msra.mxu0 0.0
      %1017 = vmatprep.subr.mxu0 0.0
      %1018 = vmatpush2.msra.mxu0 0.0
      %1019 = vmatprep.subr.mxu0 0.0
      %1020 = vmatpush2.msra.mxu0 0.0
      %1021 = vmatprep.subr.mxu0 0.0
      %1022 = vmatpush2.msra.mxu0 0.0
      %1023 = vmatprep.subr.mxu0 0.0
      %1024 = vmatpush2.msra.mxu0 0.0
      %1025 = vmatprep.mubr.f32.mxu0 0.0
      %1026 = vmatmul.mubr.f32.gmra.mxu0 %v554
      %v1027 = vpop.f32.mrf.mxu0
      %v1028 = vadd.f32 %v550, %v1027
      %v1029 = vpop.f32.mrf.mxu0
      %v1030 = vadd.f32 %v550, %v1029
      %1031 = vdwg.mxu0
      %v1032 = vmax.f32 %v1028, 0.0
      %v1033 = vmax.f32 %v1030, 0.0
      %1034 = vrot.lane.b32.xlu0 %v1032, 17
      %v1035 = vpop.permute.xlu0 %1034
      %1036 = vrot.lane.b32.xlu0 %v1033, 17
      %v1037 = vpop.permute.xlu0 %1036
      %v1038 = vsel %vm379, %v1035, %v1037
      %v1039 = vsel %vm379, %v1037, %v1035
      %v1040 = vmul.f32 %v1039, %v385
      %v1041 = vmul.f32 %v1038, %v389
      %1042 = vst [vmem:[#allocation2] sm:$0xff] %v1040
      %1043 = vst [vmem:[#allocation2 + $0x8] sm:$0xff] %v1041
      %1044 = vrot.lane.b32.xlu0 %v1032, 16
      %v1045 = vpop.permute.xlu0 %1044
      %1046 = vrot.lane.b32.xlu0 %v1033, 16
      %v1047 = vpop.permute.xlu0 %1046
      %v1048 = vsel %vm398, %v1045, %v1047
      %v1049 = vsel %vm398, %v1047, %v1045
      %v1050 = vmul.f32 %v1049, %v404
      %v1051 = vmul.f32 %v1048, %v408
      %1052 = vst [vmem:[#allocation2 + $0x10] sm:$0xff] %v1050
      %1053 = vst [vmem:[#allocation2 + $0x18] sm:$0xff] %v1051
      %1054 = vrot.lane.b32.xlu0 %v1032, 15
      %v1055 = vpop.permute.xlu0 %1054
      %1056 = vrot.lane.b32.xlu0 %v1033, 15
      %v1057 = vpop.permute.xlu0 %1056
      %v1058 = vsel %vm417, %v1055, %v1057
      %v1059 = vsel %vm417, %v1057, %v1055
      %v1060 = vmul.f32 %v1059, %v423
      %v1061 = vmul.f32 %v1058, %v427
      %1062 = vst [vmem:[#allocation2 + $0x20] sm:$0xff] %v1060
      %1063 = vst [vmem:[#allocation2 + $0x28] sm:$0xff] %v1061
      %1064 = vrot.lane.b32.xlu0 %v1032, 1
      %v1065 = vpop.permute.xlu0 %1064
      %1066 = vrot.lane.b32.xlu0 %v1033, 1
      %v1067 = vpop.permute.xlu0 %1066
      %v1068 = vsel %vm436, %v1065, %v1067
      %v1069 = vsel %vm436, %v1067, %v1065
      %v1070 = vmul.f32 %v1069, %v442
      %v1071 = vmul.f32 %v1068, %v446
      %1072 = vst [vmem:[#allocation2 + $0x30] sm:$0xff] %v1070
      %1073 = vst [vmem:[#allocation2 + $0x38] sm:$0xff] %v1071
      %1074 = vst [vmem:[#allocation2 + $0x40] sm:$0xff] %v1032
      %1075 = vst [vmem:[#allocation2 + $0x48] sm:$0xff] %v1033
      %1076 = vrot.lane.b32.xlu0 %v1032, 127
      %v1077 = vpop.permute.xlu0 %1076
      %1078 = vrot.lane.b32.xlu0 %v1033, 127
      %v1079 = vpop.permute.xlu0 %1078
      %v1080 = vsel %vm457, %v1077, %v1079
      %v1081 = vsel %vm457, %v1079, %v1077
      %v1082 = vmul.f32 %v1080, %v463
      %v1083 = vmul.f32 %v1081, %v467
      %1084 = vst [vmem:[#allocation2 + $0x50] sm:$0xff] %v1082
      %1085 = vst [vmem:[#allocation2 + $0x58] sm:$0xff] %v1083
      %1086 = vrot.lane.b32.xlu0 %v1032, 113
      %v1087 = vpop.permute.xlu0 %1086
      %1088 = vrot.lane.b32.xlu0 %v1033, 113
      %v1089 = vpop.permute.xlu0 %1088
      %v1090 = vsel %vm476, %v1087, %v1089
      %v1091 = vsel %vm476, %v1089, %v1087
      %v1092 = vmul.f32 %v1090, %v482
      %v1093 = vmul.f32 %v1091, %v486
      %1094 = vst [vmem:[#allocation2 + $0x60] sm:$0xff] %v1092
      %1095 = vst [vmem:[#allocation2 + $0x68] sm:$0xff] %v1093
      %1096 = vrot.lane.b32.xlu0 %v1032, 112
      %v1097 = vpop.permute.xlu0 %1096
      %1098 = vrot.lane.b32.xlu0 %v1033, 112
      %v1099 = vpop.permute.xlu0 %1098
      %v1100 = vsel %vm495, %v1097, %v1099
      %v1101 = vsel %vm495, %v1099, %v1097
      %v1102 = vmul.f32 %v1100, %v501
      %v1103 = vmul.f32 %v1101, %v505
      %1104 = vst [vmem:[#allocation2 + $0x70] sm:$0xff] %v1102
      %1105 = vst [vmem:[#allocation2 + $0x78] sm:$0xff] %v1103
      %1106 = vrot.lane.b32.xlu0 %v1032, 111
      %v1107 = vpop.permute.xlu0 %1106
      %1108 = vrot.lane.b32.xlu0 %v1033, 111
      %v1109 = vpop.permute.xlu0 %1108
      %v1110 = vsel %vm514, %v1107, %v1109
      %v1111 = vsel %vm514, %v1109, %v1107
      %v1112 = vmul.f32 %v1110, %v520
      %v1113 = vmul.f32 %v1111, %v524
      %1114 = vst [vmem:[#allocation2 + $0x80] sm:$0xff] %v1112
      %1115 = vst [vmem:[#allocation2 + $0x88] sm:$0xff] %v1113
      %v1116 = vld [vmem:[#allocation2] sm:$0xff]
      %v1117 = vld [vmem:[#allocation2 + $0x8] sm:$0xff]
      %v1118 = vld [vmem:[#allocation2 + $0x10] sm:$0xff]
      %v1119 = vld [vmem:[#allocation2 + $0x18] sm:$0xff]
      %v1120 = vld [vmem:[#allocation2 + $0x20] sm:$0xff]
      %v1121 = vld [vmem:[#allocation2 + $0x28] sm:$0xff]
      %v1122 = vld [vmem:[#allocation2 + $0x30] sm:$0xff]
      %v1123 = vld [vmem:[#allocation2 + $0x38] sm:$0xff]
      %v1124 = vld [vmem:[#allocation2 + $0x40] sm:$0xff]
      %v1125 = vld [vmem:[#allocation2 + $0x48] sm:$0xff]
      %v1126 = vld [vmem:[#allocation2 + $0x50] sm:$0xff]
      %v1127 = vld [vmem:[#allocation2 + $0x58] sm:$0xff]
      %v1128 = vld [vmem:[#allocation2 + $0x60] sm:$0xff]
      %v1129 = vld [vmem:[#allocation2 + $0x68] sm:$0xff]
      %v1130 = vld [vmem:[#allocation2 + $0x70] sm:$0xff]
      %v1131 = vld [vmem:[#allocation2 + $0x78] sm:$0xff]
      %v1132 = vld [vmem:[#allocation2 + $0x80] sm:$0xff]
      %v1133 = vld [vmem:[#allocation2 + $0x88] sm:$0xff]
      %1134 = vmatprep.subr.mxu0 0.0
      %1135 = vmatpush1.msra.mxu0 0.0
      %1136 = vmatprep.subr.mxu0 0.0
      %1137 = vmatpush1.msra.mxu0 0.0
      %1138 = vmatprep.subr.mxu0 0.0
      %1139 = vmatpush1.msra.mxu0 0.0
      %1140 = vmatprep.subr.mxu0 0.0
      %1141 = vmatpush1.msra.mxu0 0.0
      %1142 = vmatprep.subr.mxu0 0.0
      %1143 = vmatpush1.msra.mxu0 0.0
      %1144 = vmatprep.subr.mxu0 0.0
      %1145 = vmatpush1.msra.mxu0 0.0
      %1146 = vmatprep.subr.mxu0 0.0
      %1147 = vmatpush1.msra.mxu0 0.0
      %1148 = vmatprep.subr.mxu0 %v1133
      %1149 = vmatpush1.msra.mxu0 %v1132
      %1150 = vmatprep.subr.mxu0 %v1131
      %1151 = vmatpush1.msra.mxu0 %v1130
      %1152 = vmatprep.subr.mxu0 %v1129
      %1153 = vmatpush1.msra.mxu0 %v1128
      %1154 = vmatprep.subr.mxu0 %v1127
      %1155 = vmatpush1.msra.mxu0 %v1126
      %1156 = vmatprep.subr.mxu0 %v1125
      %1157 = vmatpush1.msra.mxu0 %v1124
      %1158 = vmatprep.subr.mxu0 %v1123
      %1159 = vmatpush1.msra.mxu0 %v1122
      %1160 = vmatprep.subr.mxu0 %v1121
      %1161 = vmatpush1.msra.mxu0 %v1120
      %1162 = vmatprep.subr.mxu0 %v1119
      %1163 = vmatpush1.msra.mxu0 %v1118
      %1164 = vmatprep.subr.mxu0 %v1117
      %1165 = vmatpush1.msra.mxu0 %v1116
      %1166 = vmatprep.subr.mxu0 0.0
      %1167 = vmatpush2.msra.mxu0 0.0
      %1168 = vmatprep.subr.mxu0 0.0
      %1169 = vmatpush2.msra.mxu0 0.0
      %1170 = vmatprep.subr.mxu0 0.0
      %1171 = vmatpush2.msra.mxu0 0.0
      %1172 = vmatprep.subr.mxu0 0.0
      %1173 = vmatpush2.msra.mxu0 0.0
      %1174 = vmatprep.subr.mxu0 0.0
      %1175 = vmatpush2.msra.mxu0 0.0
      %1176 = vmatprep.subr.mxu0 0.0
      %1177 = vmatpush2.msra.mxu0 0.0
      %1178 = vmatprep.subr.mxu0 0.0
      %1179 = vmatpush2.msra.mxu0 0.0
      %1180 = vmatprep.subr.mxu0 0.0
      %1181 = vmatpush2.msra.mxu0 0.0
      %1182 = vmatprep.subr.mxu0 0.0
      %1183 = vmatpush2.msra.mxu0 0.0
      %1184 = vmatprep.subr.mxu0 0.0
      %1185 = vmatpush2.msra.mxu0 0.0
      %1186 = vmatprep.subr.mxu0 0.0
      %1187 = vmatpush2.msra.mxu0 0.0
      %1188 = vmatprep.subr.mxu0 0.0
      %1189 = vmatpush2.msra.mxu0 0.0
      %1190 = vmatprep.subr.mxu0 0.0
      %1191 = vmatpush2.msra.mxu0 0.0
      %1192 = vmatprep.subr.mxu0 0.0
      %1193 = vmatpush2.msra.mxu0 0.0
      %1194 = vmatprep.subr.mxu0 0.0
      %1195 = vmatpush2.msra.mxu0 0.0
      %1196 = vmatprep.subr.mxu0 0.0
      %1197 = vmatpush2.msra.mxu0 0.0
      %1198 = vmatprep.mubr.f32.mxu0 0.0
      %1199 = vmatmul.mubr.f32.gmra.mxu0 %v740
      %v1200 = vpop.f32.mrf.mxu0
      %v1201 = vadd.f32 %v732, %v1200
      %v1202 = vpop.f32.mrf.mxu0
      %v1203 = vadd.f32 %v732, %v1202
      %1204 = vmatprep.mubr.f32.mxu0 0.0
      %1205 = vmatmul.mubr.f32.gmra.mxu0 %v743
      %v1206 = vpop.f32.mrf.mxu0
      %v1207 = vadd.f32 %v737, %v1206
      %v1208 = vpop.f32.mrf.mxu0
      %v1209 = vadd.f32 %v737, %v1208
      %1210 = vdwg.mxu0
      %v1211 = vadd.f32 %v859, %v860
      %1212 = vadd.xlane.f32.xlu0 %v1211
      %v1213 = vpop.xlane.xlu0 %1212
      %v1214 = vmul.f32 %v1213, %v825
      %v1215 = vsub.f32 %v859, %v1214
      %v1216 = vsub.f32 %v860, %v1214
      %v1217 = vmul.f32 %v1215, %v1215
      %v1218 = vmul.f32 %v1216, %v1216
      %v1219 = vadd.f32 %v1217, %v1218
      %1220 = vadd.xlane.f32.xlu0 %v1219
      %v1221 = vpop.xlane.xlu0 %1220
      %v1222 = vmul.f32 %v1221, %v834
      %v1223 = vrsqrt.pop %v1222
      %v1224 = vmul.f32 %v1222, %v1223
      %vm1225 = vcmp.eq.f32.partialorder %v1222, inf
      %v1226 = vsel %vm1225, %v1222, %v1224
      %vm1227 = vcmp.eq.f32.partialorder %v1222, 0.0
      %v1228 = vand.u32 %v1222, 2147483648
      %v1229 = vsel %vm1227, %v1228, %v1226
      %v1230 = vadd.f32 %v1201, %v1229
      %v1231 = vadd.f32 %v1203, %v1229
      %v1232 = vsub.f32 0.0, %v1230
      %v1233 = vsub.f32 0.0, %v1231
      %v1234 = vmul.f32 %v1232, 1.442695
      %v1235 = vpow.pop %v1234
      %v1236 = vmul.f32 %v1233, 1.442695
      %v1237 = vpow.pop %v1236
      %v1238 = vadd.f32 %v1235, 1.0
      %v1239 = vadd.f32 %v1237, 1.0
      %v1240 = vrcp.pop %v1238
      %v1241 = vrcp.pop %v1239
      %v1242 = vmul.f32 %v369, %v1240
      %v1243 = vmul.f32 %v371, %v1241
      %v1244 = vadd.f32 %v1207, %v1214
      %v1245 = vadd.f32 %v1209, %v1214
      %v1246 = vadd.f32 %v1242, %v1244
      %v1247 = vadd.f32 %v1243, %v1245
      %1248 = vst [vmem:[%s244] sm:$0xff] %v1246
      %1249 = vst [vmem:[%s244 + $0x8] sm:$0xff] %v1247
      %p1250 = scmp.lt.s32.totalorder %s16, 1
      %s1251 = scalar_select %p1250, %s16, 1
      %s1252 = smul.addr %s1251, 2
      %s1253 = smul.addr %s1252, 8
      %s1254 = scalar_lea.vmem %s5, %s1253
      // Predicated region
      $region41: #{esab_forward.1} parent=39 // pred_check
        %p1255 = pneg %p149
      $region42: #{esab_forward.1} parent=39 // pred_check_branch
        %1257 = sbr.rel (%p1255) target = $region44
      $region43: #{esab_forward.1} parent=39 // pred_region
        _
      $region44: #{esab_forward.1} parent=39 // pred_fallthru
        _
    $region40: #{esab_forward.1} parent=5 // pred_fallthru
      _
    %p1258 = scmp.le.s32.totalorder 2, %s11
    // Predicated region
    $region45: #{esab_forward.1} parent=5 // pred_check
      %p1259 = pneg %p1258
    $region46: #{esab_forward.1} parent=5 // pred_check_branch
      %1261 = sbr.rel (%p1259) target = $region48
    $region47: #{esab_forward.1} parent=5 // pred_region
      %s1262 = ssub.s32 %s11, 2
      // Predicated region
      $region49: #{esab_forward.1} parent=47 // pred_check
        %p1263 = pneg %p155
      $region50: #{esab_forward.1} parent=47 // pred_check_branch
        %1265 = sbr.rel (%p1263) target = $region52
      $region51: #{esab_forward.1} parent=47 // pred_region
        %p1266 = scmp.lt.s32.totalorder %s17, 1
        %s1267 = scalar_select %p1266, %s17, 1
        %s1268 = smul.addr %s1267, 2
        %s1269 = smul.addr %s1268, 8
        %s1270 = scalar_lea.vmem %s5, %s1269
      $region52: #{esab_forward.1} parent=47 // pred_fallthru
        _
    $region48: #{esab_forward.1} parent=5 // pred_fallthru
      _
  $region6: #{esab_forward.1} parent=0 // loop_footer
    %s15 = sadd.s32 1, %s11
  $region7: #{esab_forward.1} parent=0 // loop_footer_branch
    %10 = sbr.rel target = $region3
  $region8: #{esab_forward.1} parent=0 // loop_exit
    _

</llo_original>
